<compile_context>
chip_gen: v6e
topology: v6e:2x2x1
jax: 0.10.0
libtpu: 0.0.40
codegen_flags: <defaults>
</compile_context>

<pallas_src>
import functools

import jax
import jax.numpy as jnp
from jax.experimental import pallas as pl
from jax.experimental.pallas import tpu as pltpu

HALF = 4       # half_in_size
HL = 50        # first_HL
SLOPE = 0.01   # nn.LeakyReLU default negative_slope
SUB = 128      # lanes per independent serial chain (live set ~4 x 7 vregs)


def _round_up(a, b):
    return (a + b - 1) // b * b


def _lrelu(v):
    return jnp.where(v >= 0, v, SLOPE * v)


def spinalnet_kernel(num_chains, sub,
                     x_ref, wproj_ref, wchain_ref, b_ref, wx_ref, bx_ref,
                     o_ref):
    """x_ref: [8, tile] feature-major (batch on lanes). o_ref: [1, tile]."""
    bx = bx_ref[0, 0]  # scalar fcx bias from SMEM (stays in sregs)

    # Static unroll over independent 128-lane sub-blocks: each is a strictly
    # serial h1->h6 chain, so multiple chains interleave to hide MXU latency.
    for c in range(num_chains):
        lo = c * sub
        xs = x_ref[:, lo:lo + sub]                      # [8, sub]

        def proj(widx, base, _xs=xs):
            # Raw-input part of fcK: K=4 contraction as 4 VPU broadcast-FMAs
            # (keeps the MXU free for the serial 50x50 chain). Weight columns
            # ([50,1] slabs) and biases are loaded at use -> short live ranges.
            acc = wproj_ref[widx, 0] * _xs[base:base + 1, :]
            for k in range(1, HALF):
                acc = acc + wproj_ref[widx, k] * _xs[base + k:base + k + 1, :]
            return acc + b_ref[widx]

        def cdot(j, h):
            # Hidden-state part of fcK: [50,50] @ [50,sub] on the MXU.
            return jnp.dot(wchain_ref[j], h, preferred_element_type=jnp.float32)

        # Serial spinal chain with incremental fcx accumulation: only the
        # current h, the running acc and the in-flight dot result are live.
        h = _lrelu(proj(0, 0))                          # h1 = lrelu(fc1(xa))
        acc = h * wx_ref[0]
        h = _lrelu(proj(1, HALF) + cdot(0, h))          # h2 = lrelu(fc2(xb|h1))
        acc = acc + h * wx_ref[1]
        h = _lrelu(proj(2, 0) + cdot(1, h))             # h3 = lrelu(fc3(xa|h2))
        acc = acc + h * wx_ref[2]
        h = _lrelu(proj(3, HALF) + cdot(2, h))          # h4 = lrelu(fc4(xb|h3))
        acc = acc + h * wx_ref[3]
        h = _lrelu(proj(2, 0) + cdot(1, h))             # h5 = lrelu(fc3(xa|h4))
        acc = acc + h * wx_ref[4]
        h = _lrelu(proj(3, HALF) + cdot(2, h))          # h6 = lrelu(fc4(xb|h5))
        acc = acc + h * wx_ref[5]

        # fcx: single cross-sublane reduce; lane-dense [1, sub] store.
        out = jnp.sum(acc, axis=0, keepdims=True) + bx
        o_ref[:, lo:lo + sub] = out.astype(o_ref.dtype)


def _resident_spec(arr):
    """Full-array block with a constant index_map -> stays VMEM-resident."""
    zeros = (0,) * arr.ndim
    return pl.BlockSpec(arr.shape, lambda i, _z=zeros: _z)


def prepare_params(params):
    """One-time parameter prep (splits / stacks hoisted out of the hot path).

    params: torch layout (W: [out, in], b: [out]).
    """
    w1, b1, w2, b2, w3, b3, w4, b4, wx, bx = params

    w2a, w2b = w2[:, :HALF], w2[:, HALF:]
    w3a, w3b = w3[:, :HALF], w3[:, HALF:]
    w4a, w4b = w4[:, :HALF], w4[:, HALF:]

    def cols(w):  # [HL, HALF] -> [HALF, HL, 1]  (per-input-feature columns)
        return jnp.transpose(w, (1, 0))[:, :, None]

    prep = {
        # Raw-input projection columns: 0=fc1(xa), 1=fc2a(xb), 2=fc3a(xa), 3=fc4a(xb)
        "wproj": jnp.stack([cols(w1), cols(w2a), cols(w3a), cols(w4a)],
                           axis=0).astype(jnp.float32),          # [4, 4, 50, 1]
        # Hidden-state chain weights: 0=fc2b, 1=fc3b, 2=fc4b
        "wchain": jnp.stack([w2b, w3b, w4b], axis=0).astype(jnp.float32),  # [3,50,50]
        "b": jnp.stack([b1, b2, b3, b4], axis=0)[:, :, None].astype(jnp.float32),  # [4,50,1]
        "wx": wx.reshape(6, HL)[:, :, None].astype(jnp.float32),  # [6, 50, 1]
        "bx": bx.reshape(1, 1).astype(jnp.float32),               # [1, 1] (SMEM)
    }
    return prep


def _tiling(n, max_tile):
    """Pick a lane-aligned tile; prefer >=2 grid steps (v7x megacore)."""
    n128 = _round_up(max(n, 1), 128)
    if n128 >= 2 * 128:
        tile = min(max_tile, _round_up((n128 + 1) // 2, 128))
    else:
        tile = n128
    tile = max(tile, 128)
    n_pad = _round_up(n128, tile)
    return tile, n_pad


def spinalnet_forward(x, prep, *, max_tile=1024):
    """x: [N, 8] float32. Returns [N, 1] float32."""
    assert max_tile % 128 == 0
    n = x.shape[0]
    tile, n_pad = _tiling(n, max_tile)
    num_tiles = n_pad // tile
    num_chains = tile // SUB

    # Single fused feature-major input slab: [8, n_pad], batch on lanes.
    xpad = jnp.pad(x.astype(jnp.float32), ((0, n_pad - n), (0, 0)))
    x_t = xpad.T

    wproj, wchain, b_all, wx, bx = (prep["wproj"], prep["wchain"], prep["b"],
                                    prep["wx"], prep["bx"])

    in_specs = [
        pl.BlockSpec((2 * HALF, tile), lambda i: (0, i)),
        _resident_spec(wproj),
        _resident_spec(wchain),
        _resident_spec(b_all),
        _resident_spec(wx),
        pl.BlockSpec(memory_space=pltpu.MemorySpace.SMEM),   # scalar fcx bias
    ]
    out_spec = pl.BlockSpec((1, tile), lambda i: (0, i))

    # Advisory cost hint for XLA scheduling around the custom call.
    flops_per_row = 2 * (4 * HL * HALF + 5 * HL * HL) + 20 * HL
    cost = pl.CostEstimate(
        flops=int(flops_per_row * n_pad),
        transcendentals=0,
        bytes_accessed=int(n_pad * (2 * HALF + 1) * 4 + 64 * 1024),
    )

    out = pl.pallas_call(
        functools.partial(spinalnet_kernel, num_chains, SUB),
        out_shape=jax.ShapeDtypeStruct((1, n_pad), jnp.float32),
        grid=(num_tiles,),
        in_specs=in_specs,
        out_specs=out_spec,
        compiler_params=pltpu.CompilerParams(
            dimension_semantics=("parallel",)),
        cost_estimate=cost,
    )(x_t, wproj, wchain, b_all, wx, bx)

    return out[0, :n].reshape(n, 1)


def ref_forward(x, params):
    """Pure-JAX replica of the torch forward (explicit concats)."""
    w1, b1, w2, b2, w3, b3, w4, b4, wx, bx = params
    x1 = _lrelu(x[:, 0:HALF] @ w1.T + b1)
    x2 = _lrelu(jnp.concatenate([x[:, HALF:2 * HALF], x1], 1) @ w2.T + b2)
    x3 = _lrelu(jnp.concatenate([x[:, 0:HALF], x2], 1) @ w3.T + b3)
    x4 = _lrelu(jnp.concatenate([x[:, HALF:2 * HALF], x3], 1) @ w4.T + b4)
    x5 = _lrelu(jnp.concatenate([x[:, 0:HALF], x4], 1) @ w3.T + b3)
    x6 = _lrelu(jnp.concatenate([x[:, HALF:2 * HALF], x5], 1) @ w4.T + b4)
    h = jnp.concatenate([x1, x2, x3, x4, x5, x6], 1)
    return h @ wx.T + bx


def make_params(key):
    """Deterministic synthetic params; shapes follow the torch __init__."""
    ks = jax.random.split(key, 10)

    def lin(kw, kb, out_f, in_f):
        scale = 1.0 / jnp.sqrt(jnp.float32(in_f))
        w = jax.random.uniform(kw, (out_f, in_f), jnp.float32, -scale, scale)
        b = jax.random.uniform(kb, (out_f,), jnp.float32, -scale, scale)
        return w, b

    w1, b1 = lin(ks[0], ks[1], HL, HALF)
    w2, b2 = lin(ks[2], ks[3], HL, HALF + HL)
    w3, b3 = lin(ks[4], ks[5], HL, HALF + HL)
    w4, b4 = lin(ks[6], ks[7], HL, HALF + HL)
    wx, bx = lin(ks[8], ks[9], 1, HL * 6)
    return (w1, b1, w2, b2, w3, b3, w4, b4, wx, bx)


if __name__ == "__main__":
    key = jax.random.PRNGKey(0)
    k_x1, k_x2, k_p = jax.random.split(key, 3)

    params = make_params(k_p)
    prep = prepare_params(params)

    # 1) Small batch: single 128-lane tile, single chain.
    n_small = 16
    x_small = jax.random.normal(k_x1, (n_small, 2 * HALF), jnp.float32)
    out_s = jax.block_until_ready(spinalnet_forward(x_small, prep))
    ref_s = ref_forward(x_small, params)
    assert out_s.shape == (n_small, 1)
    assert bool(jnp.allclose(out_s, ref_s, atol=1e-4, rtol=1e-4))

    # 2) Batch like the original script (size_x = 1000): 2 grid steps
    #    ("parallel" -> both v7x TensorCores), 4 x 128-lane chains per step.
    n_big = 1000
    x_big = jax.random.normal(k_x2, (n_big, 2 * HALF), jnp.float32)
    out_b = jax.block_until_ready(spinalnet_forward(x_big, prep))
    ref_b = ref_forward(x_big, params)
    assert out_b.shape == (n_big, 1)
    assert bool(jnp.allclose(out_b, ref_b, atol=1e-4, rtol=1e-4))

    print("KERNEL_OK")
</pallas_src>

<mosaic_0001>
module attributes {stable_mosaic.version = 11 : i64} {
  func.func @spinalnet_kernel(%arg0: i32, %arg1: memref<8x128xf32, #tpu.memory_space<vmem>>, %arg2: memref<4x4x50x1xf32, #tpu.memory_space<vmem>>, %arg3: memref<3x50x50xf32, #tpu.memory_space<vmem>>, %arg4: memref<4x50x1xf32, #tpu.memory_space<vmem>>, %arg5: memref<6x50x1xf32, #tpu.memory_space<vmem>>, %arg6: memref<1x1xf32, #tpu.memory_space<smem>>, %arg7: memref<1x128xf32, #tpu.memory_space<vmem>>) attributes {dimension_semantics = [#tpu.dimension_semantics<parallel>], iteration_bounds = array<i64: 1>, scalar_prefetch = 0 : i64, scratch_operands = 0 : i64, tpu.core_type = #tpu.core_type<tc>, window_params = [{transform_indices = @transform_0, window_bounds = array<i64: 8, 128>}, {pipeline_mode = #tpu.pipeline_mode<synchronous>, transform_indices = @transform_1, window_bounds = array<i64: 4, 4, 50, 1>}, {pipeline_mode = #tpu.pipeline_mode<synchronous>, transform_indices = @transform_2, window_bounds = array<i64: 3, 50, 50>}, {pipeline_mode = #tpu.pipeline_mode<synchronous>, transform_indices = @transform_3, window_bounds = array<i64: 4, 50, 1>}, {pipeline_mode = #tpu.pipeline_mode<synchronous>, transform_indices = @transform_4, window_bounds = array<i64: 6, 50, 1>}, {transform_indices = @transform_5, window_bounds = array<i64: 1, 1>}, {transform_indices = @transform_6, window_bounds = array<i64: 1, 128>}]} {
    %c0 = arith.constant 0 : index
    %c0_0 = arith.constant 0 : index
    %0 = memref.load %arg6[%c0, %c0_0] : memref<1x1xf32, #tpu.memory_space<smem>>
    %c0_1 = arith.constant 0 : index
    %c0_2 = arith.constant 0 : index
    %1 = vector.load %arg1[%c0_1, %c0_2] : memref<8x128xf32, #tpu.memory_space<vmem>>, vector<8x128xf32>
    %c0_3 = arith.constant 0 : index
    %c0_4 = arith.constant 0 : index
    %c0_5 = arith.constant 0 : index
    %c0_6 = arith.constant 0 : index
    %2 = vector.load %arg2[%c0_3, %c0_4, %c0_5, %c0_6] : memref<4x4x50x1xf32, #tpu.memory_space<vmem>>, vector<1x1x50x1xf32>
    %3 = vector.shape_cast %2 : vector<1x1x50x1xf32> to vector<50x1xf32>
    %4 = vector.extract_strided_slice %1 {offsets = [0, 0], sizes = [1, 128], strides = [1, 1]} : vector<8x128xf32> to vector<1x128xf32>
    %5 = vector.broadcast %3 : vector<50x1xf32> to vector<50x128xf32>
    %6 = vector.broadcast %4 : vector<1x128xf32> to vector<50x128xf32>
    %7 = arith.mulf %5, %6 : vector<50x128xf32>
    %c0_7 = arith.constant 0 : index
    %c1 = arith.constant 1 : index
    %c0_8 = arith.constant 0 : index
    %c0_9 = arith.constant 0 : index
    %8 = vector.load %arg2[%c0_7, %c1, %c0_8, %c0_9] : memref<4x4x50x1xf32, #tpu.memory_space<vmem>>, vector<1x1x50x1xf32>
    %9 = vector.shape_cast %8 : vector<1x1x50x1xf32> to vector<50x1xf32>
    %10 = vector.extract_strided_slice %1 {offsets = [1, 0], sizes = [1, 128], strides = [1, 1]} : vector<8x128xf32> to vector<1x128xf32>
    %11 = vector.broadcast %9 : vector<50x1xf32> to vector<50x128xf32>
    %12 = vector.broadcast %10 : vector<1x128xf32> to vector<50x128xf32>
    %13 = arith.mulf %11, %12 : vector<50x128xf32>
    %14 = arith.addf %7, %13 : vector<50x128xf32>
    %c0_10 = arith.constant 0 : index
    %c2 = arith.constant 2 : index
    %c0_11 = arith.constant 0 : index
    %c0_12 = arith.constant 0 : index
    %15 = vector.load %arg2[%c0_10, %c2, %c0_11, %c0_12] : memref<4x4x50x1xf32, #tpu.memory_space<vmem>>, vector<1x1x50x1xf32>
    %16 = vector.shape_cast %15 : vector<1x1x50x1xf32> to vector<50x1xf32>
    %17 = vector.extract_strided_slice %1 {offsets = [2, 0], sizes = [1, 128], strides = [1, 1]} : vector<8x128xf32> to vector<1x128xf32>
    %18 = vector.broadcast %16 : vector<50x1xf32> to vector<50x128xf32>
    %19 = vector.broadcast %17 : vector<1x128xf32> to vector<50x128xf32>
    %20 = arith.mulf %18, %19 : vector<50x128xf32>
    %21 = arith.addf %14, %20 : vector<50x128xf32>
    %c0_13 = arith.constant 0 : index
    %c3 = arith.constant 3 : index
    %c0_14 = arith.constant 0 : index
    %c0_15 = arith.constant 0 : index
    %22 = vector.load %arg2[%c0_13, %c3, %c0_14, %c0_15] : memref<4x4x50x1xf32, #tpu.memory_space<vmem>>, vector<1x1x50x1xf32>
    %23 = vector.shape_cast %22 : vector<1x1x50x1xf32> to vector<50x1xf32>
    %24 = vector.extract_strided_slice %1 {offsets = [3, 0], sizes = [1, 128], strides = [1, 1]} : vector<8x128xf32> to vector<1x128xf32>
    %25 = vector.broadcast %23 : vector<50x1xf32> to vector<50x128xf32>
    %26 = vector.broadcast %24 : vector<1x128xf32> to vector<50x128xf32>
    %27 = arith.mulf %25, %26 : vector<50x128xf32>
    %28 = arith.addf %21, %27 : vector<50x128xf32>
    %c0_16 = arith.constant 0 : index
    %c0_17 = arith.constant 0 : index
    %c0_18 = arith.constant 0 : index
    %29 = vector.load %arg4[%c0_16, %c0_17, %c0_18] : memref<4x50x1xf32, #tpu.memory_space<vmem>>, vector<1x50x1xf32>
    %30 = vector.shape_cast %29 : vector<1x50x1xf32> to vector<50x1xf32>
    %31 = vector.broadcast %30 : vector<50x1xf32> to vector<50x128xf32>
    %32 = arith.addf %28, %31 : vector<50x128xf32>
    %cst = arith.constant 0.000000e+00 : f32
    %33 = vector.broadcast %cst : f32 to vector<50x128xf32>
    %34 = arith.cmpf oge, %32, %33 : vector<50x128xf32>
    %cst_19 = arith.constant 0.00999999977 : f32
    %35 = vector.broadcast %cst_19 : f32 to vector<50x128xf32>
    %36 = arith.mulf %35, %32 : vector<50x128xf32>
    %37 = arith.select %34, %32, %36 : vector<50x128xi1>, vector<50x128xf32>
    %c0_20 = arith.constant 0 : index
    %c0_21 = arith.constant 0 : index
    %c0_22 = arith.constant 0 : index
    %38 = vector.load %arg5[%c0_20, %c0_21, %c0_22] : memref<6x50x1xf32, #tpu.memory_space<vmem>>, vector<1x50x1xf32>
    %39 = vector.shape_cast %38 : vector<1x50x1xf32> to vector<50x1xf32>
    %40 = vector.broadcast %39 : vector<50x1xf32> to vector<50x128xf32>
    %41 = arith.mulf %37, %40 : vector<50x128xf32>
    %c1_23 = arith.constant 1 : index
    %c0_24 = arith.constant 0 : index
    %c0_25 = arith.constant 0 : index
    %c0_26 = arith.constant 0 : index
    %42 = vector.load %arg2[%c1_23, %c0_24, %c0_25, %c0_26] : memref<4x4x50x1xf32, #tpu.memory_space<vmem>>, vector<1x1x50x1xf32>
    %43 = vector.shape_cast %42 : vector<1x1x50x1xf32> to vector<50x1xf32>
    %44 = vector.extract_strided_slice %1 {offsets = [4, 0], sizes = [1, 128], strides = [1, 1]} : vector<8x128xf32> to vector<1x128xf32>
    %45 = vector.broadcast %43 : vector<50x1xf32> to vector<50x128xf32>
    %46 = vector.broadcast %44 : vector<1x128xf32> to vector<50x128xf32>
    %47 = arith.mulf %45, %46 : vector<50x128xf32>
    %c1_27 = arith.constant 1 : index
    %c1_28 = arith.constant 1 : index
    %c0_29 = arith.constant 0 : index
    %c0_30 = arith.constant 0 : index
    %48 = vector.load %arg2[%c1_27, %c1_28, %c0_29, %c0_30] : memref<4x4x50x1xf32, #tpu.memory_space<vmem>>, vector<1x1x50x1xf32>
    %49 = vector.shape_cast %48 : vector<1x1x50x1xf32> to vector<50x1xf32>
    %50 = vector.extract_strided_slice %1 {offsets = [5, 0], sizes = [1, 128], strides = [1, 1]} : vector<8x128xf32> to vector<1x128xf32>
    %51 = vector.broadcast %49 : vector<50x1xf32> to vector<50x128xf32>
    %52 = vector.broadcast %50 : vector<1x128xf32> to vector<50x128xf32>
    %53 = arith.mulf %51, %52 : vector<50x128xf32>
    %54 = arith.addf %47, %53 : vector<50x128xf32>
    %c1_31 = arith.constant 1 : index
    %c2_32 = arith.constant 2 : index
    %c0_33 = arith.constant 0 : index
    %c0_34 = arith.constant 0 : index
    %55 = vector.load %arg2[%c1_31, %c2_32, %c0_33, %c0_34] : memref<4x4x50x1xf32, #tpu.memory_space<vmem>>, vector<1x1x50x1xf32>
    %56 = vector.shape_cast %55 : vector<1x1x50x1xf32> to vector<50x1xf32>
    %57 = vector.extract_strided_slice %1 {offsets = [6, 0], sizes = [1, 128], strides = [1, 1]} : vector<8x128xf32> to vector<1x128xf32>
    %58 = vector.broadcast %56 : vector<50x1xf32> to vector<50x128xf32>
    %59 = vector.broadcast %57 : vector<1x128xf32> to vector<50x128xf32>
    %60 = arith.mulf %58, %59 : vector<50x128xf32>
    %61 = arith.addf %54, %60 : vector<50x128xf32>
    %c1_35 = arith.constant 1 : index
    %c3_36 = arith.constant 3 : index
    %c0_37 = arith.constant 0 : index
    %c0_38 = arith.constant 0 : index
    %62 = vector.load %arg2[%c1_35, %c3_36, %c0_37, %c0_38] : memref<4x4x50x1xf32, #tpu.memory_space<vmem>>, vector<1x1x50x1xf32>
    %63 = vector.shape_cast %62 : vector<1x1x50x1xf32> to vector<50x1xf32>
    %64 = vector.extract_strided_slice %1 {offsets = [7, 0], sizes = [1, 128], strides = [1, 1]} : vector<8x128xf32> to vector<1x128xf32>
    %65 = vector.broadcast %63 : vector<50x1xf32> to vector<50x128xf32>
    %66 = vector.broadcast %64 : vector<1x128xf32> to vector<50x128xf32>
    %67 = arith.mulf %65, %66 : vector<50x128xf32>
    %68 = arith.addf %61, %67 : vector<50x128xf32>
    %c1_39 = arith.constant 1 : index
    %c0_40 = arith.constant 0 : index
    %c0_41 = arith.constant 0 : index
    %69 = vector.load %arg4[%c1_39, %c0_40, %c0_41] : memref<4x50x1xf32, #tpu.memory_space<vmem>>, vector<1x50x1xf32>
    %70 = vector.shape_cast %69 : vector<1x50x1xf32> to vector<50x1xf32>
    %71 = vector.broadcast %70 : vector<50x1xf32> to vector<50x128xf32>
    %72 = arith.addf %68, %71 : vector<50x128xf32>
    %c0_42 = arith.constant 0 : index
    %c0_43 = arith.constant 0 : index
    %c0_44 = arith.constant 0 : index
    %73 = vector.load %arg3[%c0_42, %c0_43, %c0_44] : memref<3x50x50xf32, #tpu.memory_space<vmem>>, vector<1x50x50xf32>
    %74 = vector.shape_cast %73 : vector<1x50x50xf32> to vector<50x50xf32>
    %cst_45 = arith.constant dense<0.000000e+00> : vector<50x128xf32>
    %75 = tpu.matmul %74, %37, %cst_45 {dimension_numbers = #tpu.dot_dimension_numbers<[1], [0], [0], [1], [0, 0, 1, 1], [], []>} : vector<50x50xf32>, vector<50x128xf32>, vector<50x128xf32> -> vector<50x128xf32>
    %76 = arith.addf %72, %75 : vector<50x128xf32>
    %cst_46 = arith.constant 0.000000e+00 : f32
    %77 = vector.broadcast %cst_46 : f32 to vector<50x128xf32>
    %78 = arith.cmpf oge, %76, %77 : vector<50x128xf32>
    %cst_47 = arith.constant 0.00999999977 : f32
    %79 = vector.broadcast %cst_47 : f32 to vector<50x128xf32>
    %80 = arith.mulf %79, %76 : vector<50x128xf32>
    %81 = arith.select %78, %76, %80 : vector<50x128xi1>, vector<50x128xf32>
    %c1_48 = arith.constant 1 : index
    %c0_49 = arith.constant 0 : index
    %c0_50 = arith.constant 0 : index
    %82 = vector.load %arg5[%c1_48, %c0_49, %c0_50] : memref<6x50x1xf32, #tpu.memory_space<vmem>>, vector<1x50x1xf32>
    %83 = vector.shape_cast %82 : vector<1x50x1xf32> to vector<50x1xf32>
    %84 = vector.broadcast %83 : vector<50x1xf32> to vector<50x128xf32>
    %85 = arith.mulf %81, %84 : vector<50x128xf32>
    %86 = arith.addf %41, %85 : vector<50x128xf32>
    %c2_51 = arith.constant 2 : index
    %c0_52 = arith.constant 0 : index
    %c0_53 = arith.constant 0 : index
    %c0_54 = arith.constant 0 : index
    %87 = vector.load %arg2[%c2_51, %c0_52, %c0_53, %c0_54] : memref<4x4x50x1xf32, #tpu.memory_space<vmem>>, vector<1x1x50x1xf32>
    %88 = vector.shape_cast %87 : vector<1x1x50x1xf32> to vector<50x1xf32>
    %89 = vector.extract_strided_slice %1 {offsets = [0, 0], sizes = [1, 128], strides = [1, 1]} : vector<8x128xf32> to vector<1x128xf32>
    %90 = vector.broadcast %88 : vector<50x1xf32> to vector<50x128xf32>
    %91 = vector.broadcast %89 : vector<1x128xf32> to vector<50x128xf32>
    %92 = arith.mulf %90, %91 : vector<50x128xf32>
    %c2_55 = arith.constant 2 : index
    %c1_56 = arith.constant 1 : index
    %c0_57 = arith.constant 0 : index
    %c0_58 = arith.constant 0 : index
    %93 = vector.load %arg2[%c2_55, %c1_56, %c0_57, %c0_58] : memref<4x4x50x1xf32, #tpu.memory_space<vmem>>, vector<1x1x50x1xf32>
    %94 = vector.shape_cast %93 : vector<1x1x50x1xf32> to vector<50x1xf32>
    %95 = vector.extract_strided_slice %1 {offsets = [1, 0], sizes = [1, 128], strides = [1, 1]} : vector<8x128xf32> to vector<1x128xf32>
    %96 = vector.broadcast %94 : vector<50x1xf32> to vector<50x128xf32>
    %97 = vector.broadcast %95 : vector<1x128xf32> to vector<50x128xf32>
    %98 = arith.mulf %96, %97 : vector<50x128xf32>
    %99 = arith.addf %92, %98 : vector<50x128xf32>
    %c2_59 = arith.constant 2 : index
    %c2_60 = arith.constant 2 : index
    %c0_61 = arith.constant 0 : index
    %c0_62 = arith.constant 0 : index
    %100 = vector.load %arg2[%c2_59, %c2_60, %c0_61, %c0_62] : memref<4x4x50x1xf32, #tpu.memory_space<vmem>>, vector<1x1x50x1xf32>
    %101 = vector.shape_cast %100 : vector<1x1x50x1xf32> to vector<50x1xf32>
    %102 = vector.extract_strided_slice %1 {offsets = [2, 0], sizes = [1, 128], strides = [1, 1]} : vector<8x128xf32> to vector<1x128xf32>
    %103 = vector.broadcast %101 : vector<50x1xf32> to vector<50x128xf32>
    %104 = vector.broadcast %102 : vector<1x128xf32> to vector<50x128xf32>
    %105 = arith.mulf %103, %104 : vector<50x128xf32>
    %106 = arith.addf %99, %105 : vector<50x128xf32>
    %c2_63 = arith.constant 2 : index
    %c3_64 = arith.constant 3 : index
    %c0_65 = arith.constant 0 : index
    %c0_66 = arith.constant 0 : index
    %107 = vector.load %arg2[%c2_63, %c3_64, %c0_65, %c0_66] : memref<4x4x50x1xf32, #tpu.memory_space<vmem>>, vector<1x1x50x1xf32>
    %108 = vector.shape_cast %107 : vector<1x1x50x1xf32> to vector<50x1xf32>
    %109 = vector.extract_strided_slice %1 {offsets = [3, 0], sizes = [1, 128], strides = [1, 1]} : vector<8x128xf32> to vector<1x128xf32>
    %110 = vector.broadcast %108 : vector<50x1xf32> to vector<50x128xf32>
    %111 = vector.broadcast %109 : vector<1x128xf32> to vector<50x128xf32>
    %112 = arith.mulf %110, %111 : vector<50x128xf32>
    %113 = arith.addf %106, %112 : vector<50x128xf32>
    %c2_67 = arith.constant 2 : index
    %c0_68 = arith.constant 0 : index
    %c0_69 = arith.constant 0 : index
    %114 = vector.load %arg4[%c2_67, %c0_68, %c0_69] : memref<4x50x1xf32, #tpu.memory_space<vmem>>, vector<1x50x1xf32>
    %115 = vector.shape_cast %114 : vector<1x50x1xf32> to vector<50x1xf32>
    %116 = vector.broadcast %115 : vector<50x1xf32> to vector<50x128xf32>
    %117 = arith.addf %113, %116 : vector<50x128xf32>
    %c1_70 = arith.constant 1 : index
    %c0_71 = arith.constant 0 : index
    %c0_72 = arith.constant 0 : index
    %118 = vector.load %arg3[%c1_70, %c0_71, %c0_72] : memref<3x50x50xf32, #tpu.memory_space<vmem>>, vector<1x50x50xf32>
    %119 = vector.shape_cast %118 : vector<1x50x50xf32> to vector<50x50xf32>
    %cst_73 = arith.constant dense<0.000000e+00> : vector<50x128xf32>
    %120 = tpu.matmul %119, %81, %cst_73 {dimension_numbers = #tpu.dot_dimension_numbers<[1], [0], [0], [1], [0, 0, 1, 1], [], []>} : vector<50x50xf32>, vector<50x128xf32>, vector<50x128xf32> -> vector<50x128xf32>
    %121 = arith.addf %117, %120 : vector<50x128xf32>
    %cst_74 = arith.constant 0.000000e+00 : f32
    %122 = vector.broadcast %cst_74 : f32 to vector<50x128xf32>
    %123 = arith.cmpf oge, %121, %122 : vector<50x128xf32>
    %cst_75 = arith.constant 0.00999999977 : f32
    %124 = vector.broadcast %cst_75 : f32 to vector<50x128xf32>
    %125 = arith.mulf %124, %121 : vector<50x128xf32>
    %126 = arith.select %123, %121, %125 : vector<50x128xi1>, vector<50x128xf32>
    %c2_76 = arith.constant 2 : index
    %c0_77 = arith.constant 0 : index
    %c0_78 = arith.constant 0 : index
    %127 = vector.load %arg5[%c2_76, %c0_77, %c0_78] : memref<6x50x1xf32, #tpu.memory_space<vmem>>, vector<1x50x1xf32>
    %128 = vector.shape_cast %127 : vector<1x50x1xf32> to vector<50x1xf32>
    %129 = vector.broadcast %128 : vector<50x1xf32> to vector<50x128xf32>
    %130 = arith.mulf %126, %129 : vector<50x128xf32>
    %131 = arith.addf %86, %130 : vector<50x128xf32>
    %c3_79 = arith.constant 3 : index
    %c0_80 = arith.constant 0 : index
    %c0_81 = arith.constant 0 : index
    %c0_82 = arith.constant 0 : index
    %132 = vector.load %arg2[%c3_79, %c0_80, %c0_81, %c0_82] : memref<4x4x50x1xf32, #tpu.memory_space<vmem>>, vector<1x1x50x1xf32>
    %133 = vector.shape_cast %132 : vector<1x1x50x1xf32> to vector<50x1xf32>
    %134 = vector.extract_strided_slice %1 {offsets = [4, 0], sizes = [1, 128], strides = [1, 1]} : vector<8x128xf32> to vector<1x128xf32>
    %135 = vector.broadcast %133 : vector<50x1xf32> to vector<50x128xf32>
    %136 = vector.broadcast %134 : vector<1x128xf32> to vector<50x128xf32>
    %137 = arith.mulf %135, %136 : vector<50x128xf32>
    %c3_83 = arith.constant 3 : index
    %c1_84 = arith.constant 1 : index
    %c0_85 = arith.constant 0 : index
    %c0_86 = arith.constant 0 : index
    %138 = vector.load %arg2[%c3_83, %c1_84, %c0_85, %c0_86] : memref<4x4x50x1xf32, #tpu.memory_space<vmem>>, vector<1x1x50x1xf32>
    %139 = vector.shape_cast %138 : vector<1x1x50x1xf32> to vector<50x1xf32>
    %140 = vector.extract_strided_slice %1 {offsets = [5, 0], sizes = [1, 128], strides = [1, 1]} : vector<8x128xf32> to vector<1x128xf32>
    %141 = vector.broadcast %139 : vector<50x1xf32> to vector<50x128xf32>
    %142 = vector.broadcast %140 : vector<1x128xf32> to vector<50x128xf32>
    %143 = arith.mulf %141, %142 : vector<50x128xf32>
    %144 = arith.addf %137, %143 : vector<50x128xf32>
    %c3_87 = arith.constant 3 : index
    %c2_88 = arith.constant 2 : index
    %c0_89 = arith.constant 0 : index
    %c0_90 = arith.constant 0 : index
    %145 = vector.load %arg2[%c3_87, %c2_88, %c0_89, %c0_90] : memref<4x4x50x1xf32, #tpu.memory_space<vmem>>, vector<1x1x50x1xf32>
    %146 = vector.shape_cast %145 : vector<1x1x50x1xf32> to vector<50x1xf32>
    %147 = vector.extract_strided_slice %1 {offsets = [6, 0], sizes = [1, 128], strides = [1, 1]} : vector<8x128xf32> to vector<1x128xf32>
    %148 = vector.broadcast %146 : vector<50x1xf32> to vector<50x128xf32>
    %149 = vector.broadcast %147 : vector<1x128xf32> to vector<50x128xf32>
    %150 = arith.mulf %148, %149 : vector<50x128xf32>
    %151 = arith.addf %144, %150 : vector<50x128xf32>
    %c3_91 = arith.constant 3 : index
    %c3_92 = arith.constant 3 : index
    %c0_93 = arith.constant 0 : index
    %c0_94 = arith.constant 0 : index
    %152 = vector.load %arg2[%c3_91, %c3_92, %c0_93, %c0_94] : memref<4x4x50x1xf32, #tpu.memory_space<vmem>>, vector<1x1x50x1xf32>
    %153 = vector.shape_cast %152 : vector<1x1x50x1xf32> to vector<50x1xf32>
    %154 = vector.extract_strided_slice %1 {offsets = [7, 0], sizes = [1, 128], strides = [1, 1]} : vector<8x128xf32> to vector<1x128xf32>
    %155 = vector.broadcast %153 : vector<50x1xf32> to vector<50x128xf32>
    %156 = vector.broadcast %154 : vector<1x128xf32> to vector<50x128xf32>
    %157 = arith.mulf %155, %156 : vector<50x128xf32>
    %158 = arith.addf %151, %157 : vector<50x128xf32>
    %c3_95 = arith.constant 3 : index
    %c0_96 = arith.constant 0 : index
    %c0_97 = arith.constant 0 : index
    %159 = vector.load %arg4[%c3_95, %c0_96, %c0_97] : memref<4x50x1xf32, #tpu.memory_space<vmem>>, vector<1x50x1xf32>
    %160 = vector.shape_cast %159 : vector<1x50x1xf32> to vector<50x1xf32>
    %161 = vector.broadcast %160 : vector<50x1xf32> to vector<50x128xf32>
    %162 = arith.addf %158, %161 : vector<50x128xf32>
    %c2_98 = arith.constant 2 : index
    %c0_99 = arith.constant 0 : index
    %c0_100 = arith.constant 0 : index
    %163 = vector.load %arg3[%c2_98, %c0_99, %c0_100] : memref<3x50x50xf32, #tpu.memory_space<vmem>>, vector<1x50x50xf32>
    %164 = vector.shape_cast %163 : vector<1x50x50xf32> to vector<50x50xf32>
    %cst_101 = arith.constant dense<0.000000e+00> : vector<50x128xf32>
    %165 = tpu.matmul %164, %126, %cst_101 {dimension_numbers = #tpu.dot_dimension_numbers<[1], [0], [0], [1], [0, 0, 1, 1], [], []>} : vector<50x50xf32>, vector<50x128xf32>, vector<50x128xf32> -> vector<50x128xf32>
    %166 = arith.addf %162, %165 : vector<50x128xf32>
    %cst_102 = arith.constant 0.000000e+00 : f32
    %167 = vector.broadcast %cst_102 : f32 to vector<50x128xf32>
    %168 = arith.cmpf oge, %166, %167 : vector<50x128xf32>
    %cst_103 = arith.constant 0.00999999977 : f32
    %169 = vector.broadcast %cst_103 : f32 to vector<50x128xf32>
    %170 = arith.mulf %169, %166 : vector<50x128xf32>
    %171 = arith.select %168, %166, %170 : vector<50x128xi1>, vector<50x128xf32>
    %c3_104 = arith.constant 3 : index
    %c0_105 = arith.constant 0 : index
    %c0_106 = arith.constant 0 : index
    %172 = vector.load %arg5[%c3_104, %c0_105, %c0_106] : memref<6x50x1xf32, #tpu.memory_space<vmem>>, vector<1x50x1xf32>
    %173 = vector.shape_cast %172 : vector<1x50x1xf32> to vector<50x1xf32>
    %174 = vector.broadcast %173 : vector<50x1xf32> to vector<50x128xf32>
    %175 = arith.mulf %171, %174 : vector<50x128xf32>
    %176 = arith.addf %131, %175 : vector<50x128xf32>
    %c2_107 = arith.constant 2 : index
    %c0_108 = arith.constant 0 : index
    %c0_109 = arith.constant 0 : index
    %c0_110 = arith.constant 0 : index
    %177 = vector.load %arg2[%c2_107, %c0_108, %c0_109, %c0_110] : memref<4x4x50x1xf32, #tpu.memory_space<vmem>>, vector<1x1x50x1xf32>
    %178 = vector.shape_cast %177 : vector<1x1x50x1xf32> to vector<50x1xf32>
    %179 = vector.extract_strided_slice %1 {offsets = [0, 0], sizes = [1, 128], strides = [1, 1]} : vector<8x128xf32> to vector<1x128xf32>
    %180 = vector.broadcast %178 : vector<50x1xf32> to vector<50x128xf32>
    %181 = vector.broadcast %179 : vector<1x128xf32> to vector<50x128xf32>
    %182 = arith.mulf %180, %181 : vector<50x128xf32>
    %c2_111 = arith.constant 2 : index
    %c1_112 = arith.constant 1 : index
    %c0_113 = arith.constant 0 : index
    %c0_114 = arith.constant 0 : index
    %183 = vector.load %arg2[%c2_111, %c1_112, %c0_113, %c0_114] : memref<4x4x50x1xf32, #tpu.memory_space<vmem>>, vector<1x1x50x1xf32>
    %184 = vector.shape_cast %183 : vector<1x1x50x1xf32> to vector<50x1xf32>
    %185 = vector.extract_strided_slice %1 {offsets = [1, 0], sizes = [1, 128], strides = [1, 1]} : vector<8x128xf32> to vector<1x128xf32>
    %186 = vector.broadcast %184 : vector<50x1xf32> to vector<50x128xf32>
    %187 = vector.broadcast %185 : vector<1x128xf32> to vector<50x128xf32>
    %188 = arith.mulf %186, %187 : vector<50x128xf32>
    %189 = arith.addf %182, %188 : vector<50x128xf32>
    %c2_115 = arith.constant 2 : index
    %c2_116 = arith.constant 2 : index
    %c0_117 = arith.constant 0 : index
    %c0_118 = arith.constant 0 : index
    %190 = vector.load %arg2[%c2_115, %c2_116, %c0_117, %c0_118] : memref<4x4x50x1xf32, #tpu.memory_space<vmem>>, vector<1x1x50x1xf32>
    %191 = vector.shape_cast %190 : vector<1x1x50x1xf32> to vector<50x1xf32>
    %192 = vector.extract_strided_slice %1 {offsets = [2, 0], sizes = [1, 128], strides = [1, 1]} : vector<8x128xf32> to vector<1x128xf32>
    %193 = vector.broadcast %191 : vector<50x1xf32> to vector<50x128xf32>
    %194 = vector.broadcast %192 : vector<1x128xf32> to vector<50x128xf32>
    %195 = arith.mulf %193, %194 : vector<50x128xf32>
    %196 = arith.addf %189, %195 : vector<50x128xf32>
    %c2_119 = arith.constant 2 : index
    %c3_120 = arith.constant 3 : index
    %c0_121 = arith.constant 0 : index
    %c0_122 = arith.constant 0 : index
    %197 = vector.load %arg2[%c2_119, %c3_120, %c0_121, %c0_122] : memref<4x4x50x1xf32, #tpu.memory_space<vmem>>, vector<1x1x50x1xf32>
    %198 = vector.shape_cast %197 : vector<1x1x50x1xf32> to vector<50x1xf32>
    %199 = vector.extract_strided_slice %1 {offsets = [3, 0], sizes = [1, 128], strides = [1, 1]} : vector<8x128xf32> to vector<1x128xf32>
    %200 = vector.broadcast %198 : vector<50x1xf32> to vector<50x128xf32>
    %201 = vector.broadcast %199 : vector<1x128xf32> to vector<50x128xf32>
    %202 = arith.mulf %200, %201 : vector<50x128xf32>
    %203 = arith.addf %196, %202 : vector<50x128xf32>
    %c2_123 = arith.constant 2 : index
    %c0_124 = arith.constant 0 : index
    %c0_125 = arith.constant 0 : index
    %204 = vector.load %arg4[%c2_123, %c0_124, %c0_125] : memref<4x50x1xf32, #tpu.memory_space<vmem>>, vector<1x50x1xf32>
    %205 = vector.shape_cast %204 : vector<1x50x1xf32> to vector<50x1xf32>
    %206 = vector.broadcast %205 : vector<50x1xf32> to vector<50x128xf32>
    %207 = arith.addf %203, %206 : vector<50x128xf32>
    %c1_126 = arith.constant 1 : index
    %c0_127 = arith.constant 0 : index
    %c0_128 = arith.constant 0 : index
    %208 = vector.load %arg3[%c1_126, %c0_127, %c0_128] : memref<3x50x50xf32, #tpu.memory_space<vmem>>, vector<1x50x50xf32>
    %209 = vector.shape_cast %208 : vector<1x50x50xf32> to vector<50x50xf32>
    %cst_129 = arith.constant dense<0.000000e+00> : vector<50x128xf32>
    %210 = tpu.matmul %209, %171, %cst_129 {dimension_numbers = #tpu.dot_dimension_numbers<[1], [0], [0], [1], [0, 0, 1, 1], [], []>} : vector<50x50xf32>, vector<50x128xf32>, vector<50x128xf32> -> vector<50x128xf32>
    %211 = arith.addf %207, %210 : vector<50x128xf32>
    %cst_130 = arith.constant 0.000000e+00 : f32
    %212 = vector.broadcast %cst_130 : f32 to vector<50x128xf32>
    %213 = arith.cmpf oge, %211, %212 : vector<50x128xf32>
    %cst_131 = arith.constant 0.00999999977 : f32
    %214 = vector.broadcast %cst_131 : f32 to vector<50x128xf32>
    %215 = arith.mulf %214, %211 : vector<50x128xf32>
    %216 = arith.select %213, %211, %215 : vector<50x128xi1>, vector<50x128xf32>
    %c4 = arith.constant 4 : index
    %c0_132 = arith.constant 0 : index
    %c0_133 = arith.constant 0 : index
    %217 = vector.load %arg5[%c4, %c0_132, %c0_133] : memref<6x50x1xf32, #tpu.memory_space<vmem>>, vector<1x50x1xf32>
    %218 = vector.shape_cast %217 : vector<1x50x1xf32> to vector<50x1xf32>
    %219 = vector.broadcast %218 : vector<50x1xf32> to vector<50x128xf32>
    %220 = arith.mulf %216, %219 : vector<50x128xf32>
    %221 = arith.addf %176, %220 : vector<50x128xf32>
    %c3_134 = arith.constant 3 : index
    %c0_135 = arith.constant 0 : index
    %c0_136 = arith.constant 0 : index
    %c0_137 = arith.constant 0 : index
    %222 = vector.load %arg2[%c3_134, %c0_135, %c0_136, %c0_137] : memref<4x4x50x1xf32, #tpu.memory_space<vmem>>, vector<1x1x50x1xf32>
    %223 = vector.shape_cast %222 : vector<1x1x50x1xf32> to vector<50x1xf32>
    %224 = vector.extract_strided_slice %1 {offsets = [4, 0], sizes = [1, 128], strides = [1, 1]} : vector<8x128xf32> to vector<1x128xf32>
    %225 = vector.broadcast %223 : vector<50x1xf32> to vector<50x128xf32>
    %226 = vector.broadcast %224 : vector<1x128xf32> to vector<50x128xf32>
    %227 = arith.mulf %225, %226 : vector<50x128xf32>
    %c3_138 = arith.constant 3 : index
    %c1_139 = arith.constant 1 : index
    %c0_140 = arith.constant 0 : index
    %c0_141 = arith.constant 0 : index
    %228 = vector.load %arg2[%c3_138, %c1_139, %c0_140, %c0_141] : memref<4x4x50x1xf32, #tpu.memory_space<vmem>>, vector<1x1x50x1xf32>
    %229 = vector.shape_cast %228 : vector<1x1x50x1xf32> to vector<50x1xf32>
    %230 = vector.extract_strided_slice %1 {offsets = [5, 0], sizes = [1, 128], strides = [1, 1]} : vector<8x128xf32> to vector<1x128xf32>
    %231 = vector.broadcast %229 : vector<50x1xf32> to vector<50x128xf32>
    %232 = vector.broadcast %230 : vector<1x128xf32> to vector<50x128xf32>
    %233 = arith.mulf %231, %232 : vector<50x128xf32>
    %234 = arith.addf %227, %233 : vector<50x128xf32>
    %c3_142 = arith.constant 3 : index
    %c2_143 = arith.constant 2 : index
    %c0_144 = arith.constant 0 : index
    %c0_145 = arith.constant 0 : index
    %235 = vector.load %arg2[%c3_142, %c2_143, %c0_144, %c0_145] : memref<4x4x50x1xf32, #tpu.memory_space<vmem>>, vector<1x1x50x1xf32>
    %236 = vector.shape_cast %235 : vector<1x1x50x1xf32> to vector<50x1xf32>
    %237 = vector.extract_strided_slice %1 {offsets = [6, 0], sizes = [1, 128], strides = [1, 1]} : vector<8x128xf32> to vector<1x128xf32>
    %238 = vector.broadcast %236 : vector<50x1xf32> to vector<50x128xf32>
    %239 = vector.broadcast %237 : vector<1x128xf32> to vector<50x128xf32>
    %240 = arith.mulf %238, %239 : vector<50x128xf32>
    %241 = arith.addf %234, %240 : vector<50x128xf32>
    %c3_146 = arith.constant 3 : index
    %c3_147 = arith.constant 3 : index
    %c0_148 = arith.constant 0 : index
    %c0_149 = arith.constant 0 : index
    %242 = vector.load %arg2[%c3_146, %c3_147, %c0_148, %c0_149] : memref<4x4x50x1xf32, #tpu.memory_space<vmem>>, vector<1x1x50x1xf32>
    %243 = vector.shape_cast %242 : vector<1x1x50x1xf32> to vector<50x1xf32>
    %244 = vector.extract_strided_slice %1 {offsets = [7, 0], sizes = [1, 128], strides = [1, 1]} : vector<8x128xf32> to vector<1x128xf32>
    %245 = vector.broadcast %243 : vector<50x1xf32> to vector<50x128xf32>
    %246 = vector.broadcast %244 : vector<1x128xf32> to vector<50x128xf32>
    %247 = arith.mulf %245, %246 : vector<50x128xf32>
    %248 = arith.addf %241, %247 : vector<50x128xf32>
    %c3_150 = arith.constant 3 : index
    %c0_151 = arith.constant 0 : index
    %c0_152 = arith.constant 0 : index
    %249 = vector.load %arg4[%c3_150, %c0_151, %c0_152] : memref<4x50x1xf32, #tpu.memory_space<vmem>>, vector<1x50x1xf32>
    %250 = vector.shape_cast %249 : vector<1x50x1xf32> to vector<50x1xf32>
    %251 = vector.broadcast %250 : vector<50x1xf32> to vector<50x128xf32>
    %252 = arith.addf %248, %251 : vector<50x128xf32>
    %c2_153 = arith.constant 2 : index
    %c0_154 = arith.constant 0 : index
    %c0_155 = arith.constant 0 : index
    %253 = vector.load %arg3[%c2_153, %c0_154, %c0_155] : memref<3x50x50xf32, #tpu.memory_space<vmem>>, vector<1x50x50xf32>
    %254 = vector.shape_cast %253 : vector<1x50x50xf32> to vector<50x50xf32>
    %cst_156 = arith.constant dense<0.000000e+00> : vector<50x128xf32>
    %255 = tpu.matmul %254, %216, %cst_156 {dimension_numbers = #tpu.dot_dimension_numbers<[1], [0], [0], [1], [0, 0, 1, 1], [], []>} : vector<50x50xf32>, vector<50x128xf32>, vector<50x128xf32> -> vector<50x128xf32>
    %256 = arith.addf %252, %255 : vector<50x128xf32>
    %cst_157 = arith.constant 0.000000e+00 : f32
    %257 = vector.broadcast %cst_157 : f32 to vector<50x128xf32>
    %258 = arith.cmpf oge, %256, %257 : vector<50x128xf32>
    %cst_158 = arith.constant 0.00999999977 : f32
    %259 = vector.broadcast %cst_158 : f32 to vector<50x128xf32>
    %260 = arith.mulf %259, %256 : vector<50x128xf32>
    %261 = arith.select %258, %256, %260 : vector<50x128xi1>, vector<50x128xf32>
    %c5 = arith.constant 5 : index
    %c0_159 = arith.constant 0 : index
    %c0_160 = arith.constant 0 : index
    %262 = vector.load %arg5[%c5, %c0_159, %c0_160] : memref<6x50x1xf32, #tpu.memory_space<vmem>>, vector<1x50x1xf32>
    %263 = vector.shape_cast %262 : vector<1x50x1xf32> to vector<50x1xf32>
    %264 = vector.broadcast %263 : vector<50x1xf32> to vector<50x128xf32>
    %265 = arith.mulf %261, %264 : vector<50x128xf32>
    %266 = arith.addf %221, %265 : vector<50x128xf32>
    %cst_161 = arith.constant dense<0.000000e+00> : vector<128xf32>
    %267 = vector.multi_reduction <add>, %266, %cst_161 [0] : vector<50x128xf32> to vector<128xf32>
    %268 = vector.shape_cast %267 : vector<128xf32> to vector<1x128xf32>
    %269 = vector.broadcast %0 : f32 to vector<1x128xf32>
    %270 = arith.addf %268, %269 : vector<1x128xf32>
    %c0_162 = arith.constant 0 : index
    %c0_163 = arith.constant 0 : index
    %271 = vector.load %arg7[%c0_162, %c0_163] : memref<1x128xf32, #tpu.memory_space<vmem>>, vector<1x128xf32>
    tpu.vector_store %arg7[%c0_162, %c0_163], %270 {strides = array<i32>} : memref<1x128xf32, #tpu.memory_space<vmem>>, vector<1x128xf32>,
    return
  }
  func.func @transform_0(%arg0: i32) -> (i32, i32) {
    %c0_i32 = arith.constant 0 : i32
    %c0_i32_0 = arith.constant 0 : i32
    return %c0_i32, %arg0 : i32, i32
  }
  func.func @transform_1(%arg0: i32) -> (i32, i32, i32, i32) {
    %c0_i32 = arith.constant 0 : i32
    %c0_i32_0 = arith.constant 0 : i32
    %c0_i32_1 = arith.constant 0 : i32
    %c0_i32_2 = arith.constant 0 : i32
    %c0_i32_3 = arith.constant 0 : i32
    return %c0_i32, %c0_i32_0, %c0_i32_1, %c0_i32_2 : i32, i32, i32, i32
  }
  func.func @transform_2(%arg0: i32) -> (i32, i32, i32) {
    %c0_i32 = arith.constant 0 : i32
    %c0_i32_0 = arith.constant 0 : i32
    %c0_i32_1 = arith.constant 0 : i32
    %c0_i32_2 = arith.constant 0 : i32
    return %c0_i32, %c0_i32_0, %c0_i32_1 : i32, i32, i32
  }
  func.func @transform_3(%arg0: i32) -> (i32, i32, i32) {
    %c0_i32 = arith.constant 0 : i32
    %c0_i32_0 = arith.constant 0 : i32
    %c0_i32_1 = arith.constant 0 : i32
    %c0_i32_2 = arith.constant 0 : i32
    return %c0_i32, %c0_i32_0, %c0_i32_1 : i32, i32, i32
  }
  func.func @transform_4(%arg0: i32) -> (i32, i32, i32) {
    %c0_i32 = arith.constant 0 : i32
    %c0_i32_0 = arith.constant 0 : i32
    %c0_i32_1 = arith.constant 0 : i32
    %c0_i32_2 = arith.constant 0 : i32
    return %c0_i32, %c0_i32_0, %c0_i32_1 : i32, i32, i32
  }
  func.func @transform_5(%arg0: i32) -> (i32, i32) {
    %c0_i32 = arith.constant 0 : i32
    %c0_i32_0 = arith.constant 0 : i32
    %c0_i32_1 = arith.constant 0 : i32
    return %c0_i32, %c0_i32_0 : i32, i32
  }
  func.func @transform_6(%arg0: i32) -> (i32, i32) {
    %c0_i32 = arith.constant 0 : i32
    %c0_i32_0 = arith.constant 0 : i32
    return %c0_i32, %arg0 : i32, i32
  }
}

</mosaic_0001>

<llo_original>
// kernel: tpu_custom_call.1
$region0: #{tpu_custom_call.1}
  #allocation0 [shape = 'u32[]', space=smem, size = 0x4, offset = 0x4, fixed_abs, tag = 'smem constant byte address 0x4 - core index']
  #allocation1 [shape = 'u32[144,128]{1,0:T(1,128)}', space=vmem, size = 0x12000, scoped, tag = 'internal scratch']
  #allocation2 [shape = 'f32[1,1]{1,0:T(1,128)S(6)}', space=smem, size = 0x200, scoped, tag = 'scoped memory for tpu_custom_call.1']
  %s0 = inlined_call_operand.vmem [shape: f32[8,128], index: 0, kind: input, shape index: {}]
  %s1 = inlined_call_operand.vmem [shape: f32[4,4,50,1], index: 1, kind: input, shape index: {}]
  %s2 = inlined_call_operand.vmem [shape: f32[3,50,50], index: 2, kind: input, shape index: {}]
  %s3 = inlined_call_operand.vmem [shape: f32[4,50,1], index: 3, kind: input, shape index: {}]
  %s4 = inlined_call_operand.vmem [shape: f32[6,50,1], index: 4, kind: input, shape index: {}]
  %s5 = inlined_call_operand.<no memory space> [shape: f32[1,1], index: 5, kind: input, shape index: {}]
  %s6 = inlined_call_operand.hbm [shape: f32[1,128], index: 6, kind: output, shape index: {}]
  %s7 = sld [smem:[#allocation0]]
  $region34: #{tpu_custom_call.1} parent=0
    _
  %s9 = ssub.s32 1, %s7
  %s10 = scalar_select 0, %s9, %s7
  %11 = sst [smem:[#allocation2]] %s5
  $region1: #{tpu_custom_call.1} parent=0
    #allocation3 [shape = 'u8[512]{0}', space=vmem, size = 0x400, scoped, tag = 'output window, operand 0, single buffered']
    #allocation4 [shape = 's32[1]{0}', space=sflag, size = 0x4, scoped, tag = 'scoped memory for tpu_custom_call.1']
    %12 = vsyncpa [#allocation4], 0
    // Predicated region
    $region2: #{tpu_custom_call.1} parent=1 // pred_check
      _
    $region3: #{tpu_custom_call.1} parent=1 // pred_check_branch
      %14 = sbr.rel (0) target = $region5
    $region4: #{tpu_custom_call.1} parent=1 // pred_region
      _
    $region5: #{tpu_custom_call.1} parent=1 // pred_fallthru
      _
    // Predicated region
    $region6: #{tpu_custom_call.1} parent=1 // pred_check
      _
    $region7: #{tpu_custom_call.1} parent=1 // pred_check_branch
      %16 = sbr.rel (0) target = $region9
    $region8: #{tpu_custom_call.1} parent=1 // pred_region
      _
    $region9: #{tpu_custom_call.1} parent=1 // pred_fallthru
      _
    // Predicated region
    $region10: #{tpu_custom_call.1} parent=1 // pred_check
      _
    $region11: #{tpu_custom_call.1} parent=1 // pred_check_branch
      %18 = sbr.rel (0) target = $region13
    $region12: #{tpu_custom_call.1} parent=1 // pred_region
      _
    $region13: #{tpu_custom_call.1} parent=1 // pred_fallthru
      _
    // Predicated region
    $region14: #{tpu_custom_call.1} parent=1 // pred_check
      _
    $region15: #{tpu_custom_call.1} parent=1 // pred_check_branch
      %20 = sbr.rel (0) target = $region17
    $region16: #{tpu_custom_call.1} parent=1 // pred_region
      _
    $region17: #{tpu_custom_call.1} parent=1 // pred_fallthru
      _
    // Predicated region
    $region18: #{tpu_custom_call.1} parent=1 // pred_check
      _
    $region19: #{tpu_custom_call.1} parent=1 // pred_check_branch
      %22 = sbr.rel (0) target = $region21
    $region20: #{tpu_custom_call.1} parent=1 // pred_region
      _
    $region21: #{tpu_custom_call.1} parent=1 // pred_fallthru
      _
    // Predicated region
    $region22: #{tpu_custom_call.1} parent=1 // pred_check
      _
    $region23: #{tpu_custom_call.1} parent=1 // pred_check_branch
      %24 = sbr.rel (0) target = $region25
    $region24: #{tpu_custom_call.1} parent=1 // pred_region
      _
    $region25: #{tpu_custom_call.1} parent=1 // pred_fallthru
      _
    %s25 = sld [smem:[#allocation2]]
    %v26 = vld [vmem:[%s0] sm:$0xff]
    %v27 = vld [vmem:[%s1] sm:$0xff]
    %v28 = vld [vmem:[%s1 + $0x8] sm:$0xff]
    %v29 = vld [vmem:[%s1 + $0x10] sm:$0xff]
    %v30 = vld [vmem:[%s1 + $0x18] sm:$0xff]
    %v31 = vld [vmem:[%s1 + $0x20] sm:$0xff]
    %v32 = vld [vmem:[%s1 + $0x28] sm:$0xff]
    %v33 = vld [vmem:[%s1 + $0x30] sm:$0x3]
    %35 = vset.pattern.permute.xlu0 0
    %36 = vperm.xlu0 %35, %v27
    %v37 = vpop.permute.xlu0 %36
    %40 = vset.pattern.permute.xlu0 0
    %41 = vperm.xlu0 %40, %v28
    %v42 = vpop.permute.xlu0 %41
    %45 = vset.pattern.permute.xlu0 0
    %46 = vperm.xlu0 %45, %v29
    %v47 = vpop.permute.xlu0 %46
    %50 = vset.pattern.permute.xlu0 0
    %51 = vperm.xlu0 %50, %v30
    %v52 = vpop.permute.xlu0 %51
    %55 = vset.pattern.permute.xlu0 0
    %56 = vperm.xlu0 %55, %v31
    %v57 = vpop.permute.xlu0 %56
    %60 = vset.pattern.permute.xlu0 0
    %61 = vperm.xlu0 %60, %v32
    %v62 = vpop.permute.xlu0 %61
    %65 = vset.pattern.permute.xlu0 0
    %66 = vperm.xlu0 %65, %v33
    %v67 = vpop.permute.xlu0 %66
    %v69 = vlaneseq
    %v70 = vshrl.u32 %v69, 7
    %v71 = vsub.s32 0, %v70
    %v72 = vrot.slane %v26, %v71
    %v73 = vmul.f32 %v37, %v72
    %v74 = vmul.f32 %v42, %v72
    %v75 = vmul.f32 %v47, %v72
    %v76 = vmul.f32 %v52, %v72
    %v77 = vmul.f32 %v57, %v72
    %v78 = vmul.f32 %v62, %v72
    %v79 = vmul.f32 %v67, %v72
    %s80 = scalar_lea.vmem %s1, 56
    %v81 = vld [vmem:[%s80] sm:$0xff]
    %v82 = vld [vmem:[%s80 + $0x8] sm:$0xff]
    %v83 = vld [vmem:[%s80 + $0x10] sm:$0xff]
    %v84 = vld [vmem:[%s80 + $0x18] sm:$0xff]
    %v85 = vld [vmem:[%s80 + $0x20] sm:$0xff]
    %v86 = vld [vmem:[%s80 + $0x28] sm:$0xff]
    %v87 = vld [vmem:[%s80 + $0x30] sm:$0x3]
    %89 = vset.pattern.permute.xlu0 0
    %90 = vperm.xlu0 %89, %v81
    %v91 = vpop.permute.xlu0 %90
    %94 = vset.pattern.permute.xlu0 0
    %95 = vperm.xlu0 %94, %v82
    %v96 = vpop.permute.xlu0 %95
    %99 = vset.pattern.permute.xlu0 0
    %100 = vperm.xlu0 %99, %v83
    %v101 = vpop.permute.xlu0 %100
    %104 = vset.pattern.permute.xlu0 0
    %105 = vperm.xlu0 %104, %v84
    %v106 = vpop.permute.xlu0 %105
    %109 = vset.pattern.permute.xlu0 0
    %110 = vperm.xlu0 %109, %v85
    %v111 = vpop.permute.xlu0 %110
    %114 = vset.pattern.permute.xlu0 0
    %115 = vperm.xlu0 %114, %v86
    %v116 = vpop.permute.xlu0 %115
    %119 = vset.pattern.permute.xlu0 0
    %120 = vperm.xlu0 %119, %v87
    %v121 = vpop.permute.xlu0 %120
    %v123 = vlaneseq
    %v124 = vshrl.u32 %v123, 7
    %v125 = vsub.s32 1, %v124
    %v126 = vrot.slane %v26, %v125
    %v127 = vmul.f32 %v91, %v126
    %v128 = vmul.f32 %v96, %v126
    %v129 = vmul.f32 %v101, %v126
    %v130 = vmul.f32 %v106, %v126
    %v131 = vmul.f32 %v111, %v126
    %v132 = vmul.f32 %v116, %v126
    %v133 = vmul.f32 %v121, %v126
    %v134 = vadd.f32 %v73, %v127
    %v135 = vadd.f32 %v74, %v128
    %v136 = vadd.f32 %v75, %v129
    %v137 = vadd.f32 %v76, %v130
    %v138 = vadd.f32 %v77, %v131
    %v139 = vadd.f32 %v78, %v132
    %v140 = vadd.f32 %v79, %v133
    %s141 = scalar_lea.vmem %s1, 112
    %v142 = vld [vmem:[%s141] sm:$0xff]
    %v143 = vld [vmem:[%s141 + $0x8] sm:$0xff]
    %v144 = vld [vmem:[%s141 + $0x10] sm:$0xff]
    %v145 = vld [vmem:[%s141 + $0x18] sm:$0xff]
    %v146 = vld [vmem:[%s141 + $0x20] sm:$0xff]
    %v147 = vld [vmem:[%s141 + $0x28] sm:$0xff]
    %v148 = vld [vmem:[%s141 + $0x30] sm:$0x3]
    %150 = vset.pattern.permute.xlu0 0
    %151 = vperm.xlu0 %150, %v142
    %v152 = vpop.permute.xlu0 %151
    %155 = vset.pattern.permute.xlu0 0
    %156 = vperm.xlu0 %155, %v143
    %v157 = vpop.permute.xlu0 %156
    %160 = vset.pattern.permute.xlu0 0
    %161 = vperm.xlu0 %160, %v144
    %v162 = vpop.permute.xlu0 %161
    %165 = vset.pattern.permute.xlu0 0
    %166 = vperm.xlu0 %165, %v145
    %v167 = vpop.permute.xlu0 %166
    %170 = vset.pattern.permute.xlu0 0
    %171 = vperm.xlu0 %170, %v146
    %v172 = vpop.permute.xlu0 %171
    %175 = vset.pattern.permute.xlu0 0
    %176 = vperm.xlu0 %175, %v147
    %v177 = vpop.permute.xlu0 %176
    %180 = vset.pattern.permute.xlu0 0
    %181 = vperm.xlu0 %180, %v148
    %v182 = vpop.permute.xlu0 %181
    %v184 = vlaneseq
    %v185 = vshrl.u32 %v184, 7
    %v186 = vsub.s32 2, %v185
    %v187 = vrot.slane %v26, %v186
    %v188 = vmul.f32 %v152, %v187
    %v189 = vmul.f32 %v157, %v187
    %v190 = vmul.f32 %v162, %v187
    %v191 = vmul.f32 %v167, %v187
    %v192 = vmul.f32 %v172, %v187
    %v193 = vmul.f32 %v177, %v187
    %v194 = vmul.f32 %v182, %v187
    %v195 = vadd.f32 %v134, %v188
    %v196 = vadd.f32 %v135, %v189
    %v197 = vadd.f32 %v136, %v190
    %v198 = vadd.f32 %v137, %v191
    %v199 = vadd.f32 %v138, %v192
    %v200 = vadd.f32 %v139, %v193
    %v201 = vadd.f32 %v140, %v194
    %s202 = scalar_lea.vmem %s1, 168
    %v203 = vld [vmem:[%s202] sm:$0xff]
    %v204 = vld [vmem:[%s202 + $0x8] sm:$0xff]
    %v205 = vld [vmem:[%s202 + $0x10] sm:$0xff]
    %v206 = vld [vmem:[%s202 + $0x18] sm:$0xff]
    %v207 = vld [vmem:[%s202 + $0x20] sm:$0xff]
    %v208 = vld [vmem:[%s202 + $0x28] sm:$0xff]
    %v209 = vld [vmem:[%s202 + $0x30] sm:$0x3]
    %211 = vset.pattern.permute.xlu0 0
    %212 = vperm.xlu0 %211, %v203
    %v213 = vpop.permute.xlu0 %212
    %216 = vset.pattern.permute.xlu0 0
    %217 = vperm.xlu0 %216, %v204
    %v218 = vpop.permute.xlu0 %217
    %221 = vset.pattern.permute.xlu0 0
    %222 = vperm.xlu0 %221, %v205
    %v223 = vpop.permute.xlu0 %222
    %226 = vset.pattern.permute.xlu0 0
    %227 = vperm.xlu0 %226, %v206
    %v228 = vpop.permute.xlu0 %227
    %231 = vset.pattern.permute.xlu0 0
    %232 = vperm.xlu0 %231, %v207
    %v233 = vpop.permute.xlu0 %232
    %236 = vset.pattern.permute.xlu0 0
    %237 = vperm.xlu0 %236, %v208
    %v238 = vpop.permute.xlu0 %237
    %241 = vset.pattern.permute.xlu0 0
    %242 = vperm.xlu0 %241, %v209
    %v243 = vpop.permute.xlu0 %242
    %v245 = vlaneseq
    %v246 = vshrl.u32 %v245, 7
    %v247 = vsub.s32 3, %v246
    %v248 = vrot.slane %v26, %v247
    %v249 = vmul.f32 %v213, %v248
    %v250 = vmul.f32 %v218, %v248
    %v251 = vmul.f32 %v223, %v248
    %v252 = vmul.f32 %v228, %v248
    %v253 = vmul.f32 %v233, %v248
    %v254 = vmul.f32 %v238, %v248
    %v255 = vmul.f32 %v243, %v248
    %v256 = vadd.f32 %v195, %v249
    %v257 = vadd.f32 %v196, %v250
    %v258 = vadd.f32 %v197, %v251
    %v259 = vadd.f32 %v198, %v252
    %v260 = vadd.f32 %v199, %v253
    %v261 = vadd.f32 %v200, %v254
    %v262 = vadd.f32 %v201, %v255
    %v263 = vld [vmem:[%s3] sm:$0xff]
    %v264 = vld [vmem:[%s3 + $0x8] sm:$0xff]
    %v265 = vld [vmem:[%s3 + $0x10] sm:$0xff]
    %v266 = vld [vmem:[%s3 + $0x18] sm:$0xff]
    %v267 = vld [vmem:[%s3 + $0x20] sm:$0xff]
    %v268 = vld [vmem:[%s3 + $0x28] sm:$0xff]
    %v269 = vld [vmem:[%s3 + $0x30] sm:$0x3]
    %271 = vset.pattern.permute.xlu0 0
    %272 = vperm.xlu0 %271, %v263
    %v273 = vpop.permute.xlu0 %272
    %276 = vset.pattern.permute.xlu0 0
    %277 = vperm.xlu0 %276, %v264
    %v278 = vpop.permute.xlu0 %277
    %281 = vset.pattern.permute.xlu0 0
    %282 = vperm.xlu0 %281, %v265
    %v283 = vpop.permute.xlu0 %282
    %286 = vset.pattern.permute.xlu0 0
    %287 = vperm.xlu0 %286, %v266
    %v288 = vpop.permute.xlu0 %287
    %291 = vset.pattern.permute.xlu0 0
    %292 = vperm.xlu0 %291, %v267
    %v293 = vpop.permute.xlu0 %292
    %296 = vset.pattern.permute.xlu0 0
    %297 = vperm.xlu0 %296, %v268
    %v298 = vpop.permute.xlu0 %297
    %301 = vset.pattern.permute.xlu0 0
    %302 = vperm.xlu0 %301, %v269
    %v303 = vpop.permute.xlu0 %302
    %v305 = vadd.f32 %v256, %v273
    %v306 = vadd.f32 %v257, %v278
    %v307 = vadd.f32 %v258, %v283
    %v308 = vadd.f32 %v259, %v288
    %v309 = vadd.f32 %v260, %v293
    %v310 = vadd.f32 %v261, %v298
    %v311 = vadd.f32 %v262, %v303
    %vm312 = vcmp.ge.f32.partialorder %v305, 0.0
    %vm313 = vcmp.ge.f32.partialorder %v306, 0.0
    %vm314 = vcmp.ge.f32.partialorder %v307, 0.0
    %vm315 = vcmp.ge.f32.partialorder %v308, 0.0
    %vm316 = vcmp.ge.f32.partialorder %v309, 0.0
    %vm317 = vcmp.ge.f32.partialorder %v310, 0.0
    %vm318 = vcmp.ge.f32.partialorder %v311, 0.0
    %v319 = vmul.f32 %v305, 0.01
    %v320 = vmul.f32 %v306, 0.01
    %v321 = vmul.f32 %v307, 0.01
    %v322 = vmul.f32 %v308, 0.01
    %v323 = vmul.f32 %v309, 0.01
    %v324 = vmul.f32 %v310, 0.01
    %v325 = vmul.f32 %v311, 0.01
    %v326 = vsel %vm312, %v305, %v319
    %v327 = vsel %vm313, %v306, %v320
    %v328 = vsel %vm314, %v307, %v321
    %v329 = vsel %vm315, %v308, %v322
    %v330 = vsel %vm316, %v309, %v323
    %v331 = vsel %vm317, %v310, %v324
    %v332 = vsel %vm318, %v311, %v325
    %v333 = vld [vmem:[%s4] sm:$0xff]
    %v334 = vld [vmem:[%s4 + $0x8] sm:$0xff]
    %v335 = vld [vmem:[%s4 + $0x10] sm:$0xff]
    %v336 = vld [vmem:[%s4 + $0x18] sm:$0xff]
    %v337 = vld [vmem:[%s4 + $0x20] sm:$0xff]
    %v338 = vld [vmem:[%s4 + $0x28] sm:$0xff]
    %v339 = vld [vmem:[%s4 + $0x30] sm:$0x3]
    %341 = vset.pattern.permute.xlu0 0
    %342 = vperm.xlu0 %341, %v333
    %v343 = vpop.permute.xlu0 %342
    %346 = vset.pattern.permute.xlu0 0
    %347 = vperm.xlu0 %346, %v334
    %v348 = vpop.permute.xlu0 %347
    %351 = vset.pattern.permute.xlu0 0
    %352 = vperm.xlu0 %351, %v335
    %v353 = vpop.permute.xlu0 %352
    %356 = vset.pattern.permute.xlu0 0
    %357 = vperm.xlu0 %356, %v336
    %v358 = vpop.permute.xlu0 %357
    %361 = vset.pattern.permute.xlu0 0
    %362 = vperm.xlu0 %361, %v337
    %v363 = vpop.permute.xlu0 %362
    %366 = vset.pattern.permute.xlu0 0
    %367 = vperm.xlu0 %366, %v338
    %v368 = vpop.permute.xlu0 %367
    %371 = vset.pattern.permute.xlu0 0
    %372 = vperm.xlu0 %371, %v339
    %v373 = vpop.permute.xlu0 %372
    %v375 = vmul.f32 %v326, %v343
    %v376 = vmul.f32 %v327, %v348
    %v377 = vmul.f32 %v328, %v353
    %v378 = vmul.f32 %v329, %v358
    %v379 = vmul.f32 %v330, %v363
    %v380 = vmul.f32 %v331, %v368
    %v381 = vmul.f32 %v332, %v373
    %s382 = scalar_lea.vmem %s1, 224
    %v383 = vld [vmem:[%s382] sm:$0xff]
    %v384 = vld [vmem:[%s382 + $0x8] sm:$0xff]
    %v385 = vld [vmem:[%s382 + $0x10] sm:$0xff]
    %v386 = vld [vmem:[%s382 + $0x18] sm:$0xff]
    %v387 = vld [vmem:[%s382 + $0x20] sm:$0xff]
    %v388 = vld [vmem:[%s382 + $0x28] sm:$0xff]
    %v389 = vld [vmem:[%s382 + $0x30] sm:$0x3]
    %391 = vset.pattern.permute.xlu0 0
    %392 = vperm.xlu0 %391, %v383
    %v393 = vpop.permute.xlu0 %392
    %396 = vset.pattern.permute.xlu0 0
    %397 = vperm.xlu0 %396, %v384
    %v398 = vpop.permute.xlu0 %397
    %401 = vset.pattern.permute.xlu0 0
    %402 = vperm.xlu0 %401, %v385
    %v403 = vpop.permute.xlu0 %402
    %406 = vset.pattern.permute.xlu0 0
    %407 = vperm.xlu0 %406, %v386
    %v408 = vpop.permute.xlu0 %407
    %411 = vset.pattern.permute.xlu0 0
    %412 = vperm.xlu0 %411, %v387
    %v413 = vpop.permute.xlu0 %412
    %416 = vset.pattern.permute.xlu0 0
    %417 = vperm.xlu0 %416, %v388
    %v418 = vpop.permute.xlu0 %417
    %421 = vset.pattern.permute.xlu0 0
    %422 = vperm.xlu0 %421, %v389
    %v423 = vpop.permute.xlu0 %422
    %v425 = vlaneseq
    %v426 = vshrl.u32 %v425, 7
    %v427 = vsub.s32 4, %v426
    %v428 = vrot.slane %v26, %v427
    %v429 = vmul.f32 %v393, %v428
    %v430 = vmul.f32 %v398, %v428
    %v431 = vmul.f32 %v403, %v428
    %v432 = vmul.f32 %v408, %v428
    %v433 = vmul.f32 %v413, %v428
    %v434 = vmul.f32 %v418, %v428
    %v435 = vmul.f32 %v423, %v428
    %s436 = scalar_lea.vmem %s1, 280
    %v437 = vld [vmem:[%s436] sm:$0xff]
    %v438 = vld [vmem:[%s436 + $0x8] sm:$0xff]
    %v439 = vld [vmem:[%s436 + $0x10] sm:$0xff]
    %v440 = vld [vmem:[%s436 + $0x18] sm:$0xff]
    %v441 = vld [vmem:[%s436 + $0x20] sm:$0xff]
    %v442 = vld [vmem:[%s436 + $0x28] sm:$0xff]
    %v443 = vld [vmem:[%s436 + $0x30] sm:$0x3]
    %445 = vset.pattern.permute.xlu0 0
    %446 = vperm.xlu0 %445, %v437
    %v447 = vpop.permute.xlu0 %446
    %450 = vset.pattern.permute.xlu0 0
    %451 = vperm.xlu0 %450, %v438
    %v452 = vpop.permute.xlu0 %451
    %455 = vset.pattern.permute.xlu0 0
    %456 = vperm.xlu0 %455, %v439
    %v457 = vpop.permute.xlu0 %456
    %460 = vset.pattern.permute.xlu0 0
    %461 = vperm.xlu0 %460, %v440
    %v462 = vpop.permute.xlu0 %461
    %465 = vset.pattern.permute.xlu0 0
    %466 = vperm.xlu0 %465, %v441
    %v467 = vpop.permute.xlu0 %466
    %470 = vset.pattern.permute.xlu0 0
    %471 = vperm.xlu0 %470, %v442
    %v472 = vpop.permute.xlu0 %471
    %475 = vset.pattern.permute.xlu0 0
    %476 = vperm.xlu0 %475, %v443
    %v477 = vpop.permute.xlu0 %476
    %v479 = vlaneseq
    %v480 = vshrl.u32 %v479, 7
    %v481 = vsub.s32 5, %v480
    %v482 = vrot.slane %v26, %v481
    %v483 = vmul.f32 %v447, %v482
    %v484 = vmul.f32 %v452, %v482
    %v485 = vmul.f32 %v457, %v482
    %v486 = vmul.f32 %v462, %v482
    %v487 = vmul.f32 %v467, %v482
    %v488 = vmul.f32 %v472, %v482
    %v489 = vmul.f32 %v477, %v482
    %v490 = vadd.f32 %v429, %v483
    %v491 = vadd.f32 %v430, %v484
    %v492 = vadd.f32 %v431, %v485
    %v493 = vadd.f32 %v432, %v486
    %v494 = vadd.f32 %v433, %v487
    %v495 = vadd.f32 %v434, %v488
    %v496 = vadd.f32 %v435, %v489
    %s497 = scalar_lea.vmem %s1, 336
    %v498 = vld [vmem:[%s497] sm:$0xff]
    %v499 = vld [vmem:[%s497 + $0x8] sm:$0xff]
    %v500 = vld [vmem:[%s497 + $0x10] sm:$0xff]
    %v501 = vld [vmem:[%s497 + $0x18] sm:$0xff]
    %v502 = vld [vmem:[%s497 + $0x20] sm:$0xff]
    %v503 = vld [vmem:[%s497 + $0x28] sm:$0xff]
    %v504 = vld [vmem:[%s497 + $0x30] sm:$0x3]
    %506 = vset.pattern.permute.xlu0 0
    %507 = vperm.xlu0 %506, %v498
    %v508 = vpop.permute.xlu0 %507
    %511 = vset.pattern.permute.xlu0 0
    %512 = vperm.xlu0 %511, %v499
    %v513 = vpop.permute.xlu0 %512
    %516 = vset.pattern.permute.xlu0 0
    %517 = vperm.xlu0 %516, %v500
    %v518 = vpop.permute.xlu0 %517
    %521 = vset.pattern.permute.xlu0 0
    %522 = vperm.xlu0 %521, %v501
    %v523 = vpop.permute.xlu0 %522
    %526 = vset.pattern.permute.xlu0 0
    %527 = vperm.xlu0 %526, %v502
    %v528 = vpop.permute.xlu0 %527
    %531 = vset.pattern.permute.xlu0 0
    %532 = vperm.xlu0 %531, %v503
    %v533 = vpop.permute.xlu0 %532
    %536 = vset.pattern.permute.xlu0 0
    %537 = vperm.xlu0 %536, %v504
    %v538 = vpop.permute.xlu0 %537
    %v540 = vlaneseq
    %v541 = vshrl.u32 %v540, 7
    %v542 = vsub.s32 6, %v541
    %v543 = vrot.slane %v26, %v542
    %v544 = vmul.f32 %v508, %v543
    %v545 = vmul.f32 %v513, %v543
    %v546 = vmul.f32 %v518, %v543
    %v547 = vmul.f32 %v523, %v543
    %v548 = vmul.f32 %v528, %v543
    %v549 = vmul.f32 %v533, %v543
    %v550 = vmul.f32 %v538, %v543
    %v551 = vadd.f32 %v490, %v544
    %v552 = vadd.f32 %v491, %v545
    %v553 = vadd.f32 %v492, %v546
    %v554 = vadd.f32 %v493, %v547
    %v555 = vadd.f32 %v494, %v548
    %v556 = vadd.f32 %v495, %v549
    %v557 = vadd.f32 %v496, %v550
    %s558 = scalar_lea.vmem %s1, 392
    %v559 = vld [vmem:[%s558] sm:$0xff]
    %v560 = vld [vmem:[%s558 + $0x8] sm:$0xff]
    %v561 = vld [vmem:[%s558 + $0x10] sm:$0xff]
    %v562 = vld [vmem:[%s558 + $0x18] sm:$0xff]
    %v563 = vld [vmem:[%s558 + $0x20] sm:$0xff]
    %v564 = vld [vmem:[%s558 + $0x28] sm:$0xff]
    %v565 = vld [vmem:[%s558 + $0x30] sm:$0x3]
    %567 = vset.pattern.permute.xlu0 0
    %568 = vperm.xlu0 %567, %v559
    %v569 = vpop.permute.xlu0 %568
    %572 = vset.pattern.permute.xlu0 0
    %573 = vperm.xlu0 %572, %v560
    %v574 = vpop.permute.xlu0 %573
    %577 = vset.pattern.permute.xlu0 0
    %578 = vperm.xlu0 %577, %v561
    %v579 = vpop.permute.xlu0 %578
    %582 = vset.pattern.permute.xlu0 0
    %583 = vperm.xlu0 %582, %v562
    %v584 = vpop.permute.xlu0 %583
    %587 = vset.pattern.permute.xlu0 0
    %588 = vperm.xlu0 %587, %v563
    %v589 = vpop.permute.xlu0 %588
    %592 = vset.pattern.permute.xlu0 0
    %593 = vperm.xlu0 %592, %v564
    %v594 = vpop.permute.xlu0 %593
    %597 = vset.pattern.permute.xlu0 0
    %598 = vperm.xlu0 %597, %v565
    %v599 = vpop.permute.xlu0 %598
    %v601 = vlaneseq
    %v602 = vshrl.u32 %v601, 7
    %v603 = vsub.s32 7, %v602
    %v604 = vrot.slane %v26, %v603
    %v605 = vmul.f32 %v569, %v604
    %v606 = vmul.f32 %v574, %v604
    %v607 = vmul.f32 %v579, %v604
    %v608 = vmul.f32 %v584, %v604
    %v609 = vmul.f32 %v589, %v604
    %v610 = vmul.f32 %v594, %v604
    %v611 = vmul.f32 %v599, %v604
    %v612 = vadd.f32 %v551, %v605
    %v613 = vadd.f32 %v552, %v606
    %v614 = vadd.f32 %v553, %v607
    %v615 = vadd.f32 %v554, %v608
    %v616 = vadd.f32 %v555, %v609
    %v617 = vadd.f32 %v556, %v610
    %v618 = vadd.f32 %v557, %v611
    %s619 = scalar_lea.vmem %s3, 56
    %v620 = vld [vmem:[%s619] sm:$0xff]
    %v621 = vld [vmem:[%s619 + $0x8] sm:$0xff]
    %v622 = vld [vmem:[%s619 + $0x10] sm:$0xff]
    %v623 = vld [vmem:[%s619 + $0x18] sm:$0xff]
    %v624 = vld [vmem:[%s619 + $0x20] sm:$0xff]
    %v625 = vld [vmem:[%s619 + $0x28] sm:$0xff]
    %v626 = vld [vmem:[%s619 + $0x30] sm:$0x3]
    %628 = vset.pattern.permute.xlu0 0
    %629 = vperm.xlu0 %628, %v620
    %v630 = vpop.permute.xlu0 %629
    %633 = vset.pattern.permute.xlu0 0
    %634 = vperm.xlu0 %633, %v621
    %v635 = vpop.permute.xlu0 %634
    %638 = vset.pattern.permute.xlu0 0
    %639 = vperm.xlu0 %638, %v622
    %v640 = vpop.permute.xlu0 %639
    %643 = vset.pattern.permute.xlu0 0
    %644 = vperm.xlu0 %643, %v623
    %v645 = vpop.permute.xlu0 %644
    %648 = vset.pattern.permute.xlu0 0
    %649 = vperm.xlu0 %648, %v624
    %v650 = vpop.permute.xlu0 %649
    %653 = vset.pattern.permute.xlu0 0
    %654 = vperm.xlu0 %653, %v625
    %v655 = vpop.permute.xlu0 %654
    %658 = vset.pattern.permute.xlu0 0
    %659 = vperm.xlu0 %658, %v626
    %v660 = vpop.permute.xlu0 %659
    %v662 = vadd.f32 %v612, %v630
    %v663 = vadd.f32 %v613, %v635
    %v664 = vadd.f32 %v614, %v640
    %v665 = vadd.f32 %v615, %v645
    %v666 = vadd.f32 %v616, %v650
    %v667 = vadd.f32 %v617, %v655
    %v668 = vadd.f32 %v618, %v660
    %v669 = vld [vmem:[%s2] sm:$0xff]
    %v670 = vld [vmem:[%s2 + $0x8] sm:$0xff]
    %v671 = vld [vmem:[%s2 + $0x10] sm:$0xff]
    %v672 = vld [vmem:[%s2 + $0x18] sm:$0xff]
    %v673 = vld [vmem:[%s2 + $0x20] sm:$0xff]
    %v674 = vld [vmem:[%s2 + $0x28] sm:$0xff]
    %v675 = vld [vmem:[%s2 + $0x30] sm:$0x3]
    %vm676 = vcmask 408576
    %v678 = vsel %vm676, %v669, 0
    %v681 = vsel %vm676, %v670, 0
    %v684 = vsel %vm676, %v671, 0
    %v687 = vsel %vm676, %v672, 0
    %v690 = vsel %vm676, %v673, 0
    %v693 = vsel %vm676, %v674, 0
    %v696 = vsel %vm676, %v675, 0
    %vm698 = vcmask 1041408
    %v700 = vsel %vm698, %v332, 0
    %702 = vmatprep.subr.mxu0 0.0
    %703 = vmatpush1.msra.mxu0 0.0
    %704 = vmatprep.subr.mxu0 0.0
    %705 = vmatpush1.msra.mxu0 0.0
    %706 = vmatprep.subr.mxu0 0.0
    %707 = vmatpush1.msra.mxu0 0.0
    %708 = vmatprep.subr.mxu0 0.0
    %709 = vmatpush1.msra.mxu0 0.0
    %710 = vmatprep.subr.mxu0 0.0
    %711 = vmatpush1.msra.mxu0 0.0
    %712 = vmatprep.subr.mxu0 0.0
    %713 = vmatpush1.msra.mxu0 0.0
    %714 = vmatprep.subr.mxu0 0.0
    %715 = vmatpush1.msra.mxu0 0.0
    %716 = vmatprep.subr.mxu0 0.0
    %717 = vmatpush1.msra.mxu0 0.0
    %718 = vmatprep.subr.mxu0 0.0
    %719 = vmatpush1.msra.mxu0 0.0
    %720 = vmatprep.subr.mxu0 0.0
    %721 = vmatpush1.msra.mxu0 %v700
    %722 = vmatprep.subr.mxu0 0.0
    %723 = vmatpush1.msra.mxu0 %v331
    %724 = vmatprep.subr.mxu0 0.0
    %725 = vmatpush1.msra.mxu0 %v330
    %726 = vmatprep.subr.mxu0 0.0
    %727 = vmatpush1.msra.mxu0 %v329
    %728 = vmatprep.subr.mxu0 0.0
    %729 = vmatpush1.msra.mxu0 %v328
    %730 = vmatprep.subr.mxu0 0.0
    %731 = vmatpush1.msra.mxu0 %v327
    %732 = vmatprep.subr.mxu0 0.0
    %733 = vmatpush1.msra.mxu0 %v326
    %734 = vmatprep.subr.mxu0 0.0
    %735 = vmatpush2.msra.mxu0 0.0
    %736 = vmatprep.subr.mxu0 0.0
    %737 = vmatpush2.msra.mxu0 0.0
    %738 = vmatprep.subr.mxu0 0.0
    %739 = vmatpush2.msra.mxu0 0.0
    %740 = vmatprep.subr.mxu0 0.0
    %741 = vmatpush2.msra.mxu0 0.0
    %742 = vmatprep.subr.mxu0 0.0
    %743 = vmatpush2.msra.mxu0 0.0
    %744 = vmatprep.subr.mxu0 0.0
    %745 = vmatpush2.msra.mxu0 0.0
    %746 = vmatprep.subr.mxu0 0.0
    %747 = vmatpush2.msra.mxu0 0.0
    %748 = vmatprep.subr.mxu0 0.0
    %749 = vmatpush2.msra.mxu0 0.0
    %750 = vmatprep.subr.mxu0 0.0
    %751 = vmatpush2.msra.mxu0 0.0
    %752 = vmatprep.subr.mxu0 0.0
    %753 = vmatpush2.msra.mxu0 0.0
    %754 = vmatprep.subr.mxu0 0.0
    %755 = vmatpush2.msra.mxu0 0.0
    %756 = vmatprep.subr.mxu0 0.0
    %757 = vmatpush2.msra.mxu0 0.0
    %758 = vmatprep.subr.mxu0 0.0
    %759 = vmatpush2.msra.mxu0 0.0
    %760 = vmatprep.subr.mxu0 0.0
    %761 = vmatpush2.msra.mxu0 0.0
    %762 = vmatprep.subr.mxu0 0.0
    %763 = vmatpush2.msra.mxu0 0.0
    %764 = vmatprep.subr.mxu0 0.0
    %765 = vmatpush2.msra.mxu0 0.0
    %766 = vmatprep.mubr.f32.mxu0 0.0
    %767 = vmatmul.mubr.f32.gmra.mxu0 %v678
    %v768 = vpop.f32.mrf.mxu0
    %v769 = vadd.f32 0.0, %v768
    %v770 = vpop.f32.mrf.mxu0
    %771 = vmatprep.mubr.f32.mxu0 0.0
    %772 = vmatmul.mubr.f32.gmra.mxu0 %v681
    %v773 = vpop.f32.mrf.mxu0
    %v774 = vadd.f32 0.0, %v773
    %v775 = vpop.f32.mrf.mxu0
    %776 = vmatprep.mubr.f32.mxu0 0.0
    %777 = vmatmul.mubr.f32.gmra.mxu0 %v684
    %v778 = vpop.f32.mrf.mxu0
    %v779 = vadd.f32 0.0, %v778
    %v780 = vpop.f32.mrf.mxu0
    %781 = vmatprep.mubr.f32.mxu0 0.0
    %782 = vmatmul.mubr.f32.gmra.mxu0 %v687
    %v783 = vpop.f32.mrf.mxu0
    %v784 = vadd.f32 0.0, %v783
    %v785 = vpop.f32.mrf.mxu0
    %786 = vmatprep.mubr.f32.mxu0 0.0
    %787 = vmatmul.mubr.f32.gmra.mxu0 %v690
    %v788 = vpop.f32.mrf.mxu0
    %v789 = vadd.f32 0.0, %v788
    %v790 = vpop.f32.mrf.mxu0
    %791 = vmatprep.mubr.f32.mxu0 0.0
    %792 = vmatmul.mubr.f32.gmra.mxu0 %v693
    %v793 = vpop.f32.mrf.mxu0
    %v794 = vadd.f32 0.0, %v793
    %v795 = vpop.f32.mrf.mxu0
    %796 = vmatprep.mubr.f32.mxu0 0.0
    %797 = vmatmul.mubr.f32.gmra.mxu0 %v696
    %v798 = vpop.f32.mrf.mxu0
    %v799 = vadd.f32 0.0, %v798
    %v800 = vpop.f32.mrf.mxu0
    %801 = vdwg.mxu0
    %v802 = vadd.f32 %v662, %v769
    %v803 = vadd.f32 %v663, %v774
    %v804 = vadd.f32 %v664, %v779
    %v805 = vadd.f32 %v665, %v784
    %v806 = vadd.f32 %v666, %v789
    %v807 = vadd.f32 %v667, %v794
    %v808 = vadd.f32 %v668, %v799
    %vm809 = vcmp.ge.f32.partialorder %v802, 0.0
    %vm810 = vcmp.ge.f32.partialorder %v803, 0.0
    %vm811 = vcmp.ge.f32.partialorder %v804, 0.0
    %vm812 = vcmp.ge.f32.partialorder %v805, 0.0
    %vm813 = vcmp.ge.f32.partialorder %v806, 0.0
    %vm814 = vcmp.ge.f32.partialorder %v807, 0.0
    %vm815 = vcmp.ge.f32.partialorder %v808, 0.0
    %v816 = vmul.f32 %v802, 0.01
    %v817 = vmul.f32 %v803, 0.01
    %v818 = vmul.f32 %v804, 0.01
    %v819 = vmul.f32 %v805, 0.01
    %v820 = vmul.f32 %v806, 0.01
    %v821 = vmul.f32 %v807, 0.01
    %v822 = vmul.f32 %v808, 0.01
    %v823 = vsel %vm809, %v802, %v816
    %v824 = vsel %vm810, %v803, %v817
    %v825 = vsel %vm811, %v804, %v818
    %v826 = vsel %vm812, %v805, %v819
    %v827 = vsel %vm813, %v806, %v820
    %v828 = vsel %vm814, %v807, %v821
    %v829 = vsel %vm815, %v808, %v822
    %s830 = scalar_lea.vmem %s4, 56
    %v831 = vld [vmem:[%s830] sm:$0xff]
    %v832 = vld [vmem:[%s830 + $0x8] sm:$0xff]
    %v833 = vld [vmem:[%s830 + $0x10] sm:$0xff]
    %v834 = vld [vmem:[%s830 + $0x18] sm:$0xff]
    %v835 = vld [vmem:[%s830 + $0x20] sm:$0xff]
    %v836 = vld [vmem:[%s830 + $0x28] sm:$0xff]
    %v837 = vld [vmem:[%s830 + $0x30] sm:$0x3]
    %839 = vset.pattern.permute.xlu0 0
    %840 = vperm.xlu0 %839, %v831
    %v841 = vpop.permute.xlu0 %840
    %844 = vset.pattern.permute.xlu0 0
    %845 = vperm.xlu0 %844, %v832
    %v846 = vpop.permute.xlu0 %845
    %849 = vset.pattern.permute.xlu0 0
    %850 = vperm.xlu0 %849, %v833
    %v851 = vpop.permute.xlu0 %850
    %854 = vset.pattern.permute.xlu0 0
    %855 = vperm.xlu0 %854, %v834
    %v856 = vpop.permute.xlu0 %855
    %859 = vset.pattern.permute.xlu0 0
    %860 = vperm.xlu0 %859, %v835
    %v861 = vpop.permute.xlu0 %860
    %864 = vset.pattern.permute.xlu0 0
    %865 = vperm.xlu0 %864, %v836
    %v866 = vpop.permute.xlu0 %865
    %869 = vset.pattern.permute.xlu0 0
    %870 = vperm.xlu0 %869, %v837
    %v871 = vpop.permute.xlu0 %870
    %v873 = vmul.f32 %v823, %v841
    %v874 = vmul.f32 %v824, %v846
    %v875 = vmul.f32 %v825, %v851
    %v876 = vmul.f32 %v826, %v856
    %v877 = vmul.f32 %v827, %v861
    %v878 = vmul.f32 %v828, %v866
    %v879 = vmul.f32 %v829, %v871
    %v880 = vadd.f32 %v375, %v873
    %v881 = vadd.f32 %v376, %v874
    %v882 = vadd.f32 %v377, %v875
    %v883 = vadd.f32 %v378, %v876
    %v884 = vadd.f32 %v379, %v877
    %v885 = vadd.f32 %v380, %v878
    %v886 = vadd.f32 %v381, %v879
    %s887 = scalar_lea.vmem %s1, 448
    %v888 = vld [vmem:[%s887] sm:$0xff]
    %v889 = vld [vmem:[%s887 + $0x8] sm:$0xff]
    %v890 = vld [vmem:[%s887 + $0x10] sm:$0xff]
    %v891 = vld [vmem:[%s887 + $0x18] sm:$0xff]
    %v892 = vld [vmem:[%s887 + $0x20] sm:$0xff]
    %v893 = vld [vmem:[%s887 + $0x28] sm:$0xff]
    %v894 = vld [vmem:[%s887 + $0x30] sm:$0x3]
    %896 = vset.pattern.permute.xlu0 0
    %897 = vperm.xlu0 %896, %v888
    %v898 = vpop.permute.xlu0 %897
    %901 = vset.pattern.permute.xlu0 0
    %902 = vperm.xlu0 %901, %v889
    %v903 = vpop.permute.xlu0 %902
    %906 = vset.pattern.permute.xlu0 0
    %907 = vperm.xlu0 %906, %v890
    %v908 = vpop.permute.xlu0 %907
    %911 = vset.pattern.permute.xlu0 0
    %912 = vperm.xlu0 %911, %v891
    %v913 = vpop.permute.xlu0 %912
    %916 = vset.pattern.permute.xlu0 0
    %917 = vperm.xlu0 %916, %v892
    %v918 = vpop.permute.xlu0 %917
    %921 = vset.pattern.permute.xlu0 0
    %922 = vperm.xlu0 %921, %v893
    %v923 = vpop.permute.xlu0 %922
    %926 = vset.pattern.permute.xlu0 0
    %927 = vperm.xlu0 %926, %v894
    %v928 = vpop.permute.xlu0 %927
    %v930 = vmul.f32 %v898, %v72
    %v931 = vmul.f32 %v903, %v72
    %v932 = vmul.f32 %v908, %v72
    %v933 = vmul.f32 %v913, %v72
    %v934 = vmul.f32 %v918, %v72
    %v935 = vmul.f32 %v923, %v72
    %v936 = vmul.f32 %v928, %v72
    %s937 = scalar_lea.vmem %s1, 504
    %v938 = vld [vmem:[%s937] sm:$0xff]
    %v939 = vld [vmem:[%s937 + $0x8] sm:$0xff]
    %v940 = vld [vmem:[%s937 + $0x10] sm:$0xff]
    %v941 = vld [vmem:[%s937 + $0x18] sm:$0xff]
    %v942 = vld [vmem:[%s937 + $0x20] sm:$0xff]
    %v943 = vld [vmem:[%s937 + $0x28] sm:$0xff]
    %v944 = vld [vmem:[%s937 + $0x30] sm:$0x3]
    %946 = vset.pattern.permute.xlu0 0
    %947 = vperm.xlu0 %946, %v938
    %v948 = vpop.permute.xlu0 %947
    %951 = vset.pattern.permute.xlu0 0
    %952 = vperm.xlu0 %951, %v939
    %v953 = vpop.permute.xlu0 %952
    %956 = vset.pattern.permute.xlu0 0
    %957 = vperm.xlu0 %956, %v940
    %v958 = vpop.permute.xlu0 %957
    %961 = vset.pattern.permute.xlu0 0
    %962 = vperm.xlu0 %961, %v941
    %v963 = vpop.permute.xlu0 %962
    %966 = vset.pattern.permute.xlu0 0
    %967 = vperm.xlu0 %966, %v942
    %v968 = vpop.permute.xlu0 %967
    %971 = vset.pattern.permute.xlu0 0
    %972 = vperm.xlu0 %971, %v943
    %v973 = vpop.permute.xlu0 %972
    %976 = vset.pattern.permute.xlu0 0
    %977 = vperm.xlu0 %976, %v944
    %v978 = vpop.permute.xlu0 %977
    %v980 = vmul.f32 %v948, %v126
    %v981 = vmul.f32 %v953, %v126
    %v982 = vmul.f32 %v958, %v126
    %v983 = vmul.f32 %v963, %v126
    %v984 = vmul.f32 %v968, %v126
    %v985 = vmul.f32 %v973, %v126
    %v986 = vmul.f32 %v978, %v126
    %v987 = vadd.f32 %v930, %v980
    %v988 = vadd.f32 %v931, %v981
    %v989 = vadd.f32 %v932, %v982
    %v990 = vadd.f32 %v933, %v983
    %v991 = vadd.f32 %v934, %v984
    %v992 = vadd.f32 %v935, %v985
    %v993 = vadd.f32 %v936, %v986
    %s994 = scalar_lea.vmem %s1, 560
    %v995 = vld [vmem:[%s994] sm:$0xff]
    %v996 = vld [vmem:[%s994 + $0x8] sm:$0xff]
    %v997 = vld [vmem:[%s994 + $0x10] sm:$0xff]
    %v998 = vld [vmem:[%s994 + $0x18] sm:$0xff]
    %v999 = vld [vmem:[%s994 + $0x20] sm:$0xff]
    %v1000 = vld [vmem:[%s994 + $0x28] sm:$0xff]
    %v1001 = vld [vmem:[%s994 + $0x30] sm:$0x3]
    %1003 = vset.pattern.permute.xlu0 0
    %1004 = vperm.xlu0 %1003, %v995
    %v1005 = vpop.permute.xlu0 %1004
    %1008 = vset.pattern.permute.xlu0 0
    %1009 = vperm.xlu0 %1008, %v996
    %v1010 = vpop.permute.xlu0 %1009
    %1013 = vset.pattern.permute.xlu0 0
    %1014 = vperm.xlu0 %1013, %v997
    %v1015 = vpop.permute.xlu0 %1014
    %1018 = vset.pattern.permute.xlu0 0
    %1019 = vperm.xlu0 %1018, %v998
    %v1020 = vpop.permute.xlu0 %1019
    %1023 = vset.pattern.permute.xlu0 0
    %1024 = vperm.xlu0 %1023, %v999
    %v1025 = vpop.permute.xlu0 %1024
    %1028 = vset.pattern.permute.xlu0 0
    %1029 = vperm.xlu0 %1028, %v1000
    %v1030 = vpop.permute.xlu0 %1029
    %1033 = vset.pattern.permute.xlu0 0
    %1034 = vperm.xlu0 %1033, %v1001
    %v1035 = vpop.permute.xlu0 %1034
    %v1037 = vmul.f32 %v1005, %v187
    %v1038 = vmul.f32 %v1010, %v187
    %v1039 = vmul.f32 %v1015, %v187
    %v1040 = vmul.f32 %v1020, %v187
    %v1041 = vmul.f32 %v1025, %v187
    %v1042 = vmul.f32 %v1030, %v187
    %v1043 = vmul.f32 %v1035, %v187
    %v1044 = vadd.f32 %v987, %v1037
    %v1045 = vadd.f32 %v988, %v1038
    %v1046 = vadd.f32 %v989, %v1039
    %v1047 = vadd.f32 %v990, %v1040
    %v1048 = vadd.f32 %v991, %v1041
    %v1049 = vadd.f32 %v992, %v1042
    %v1050 = vadd.f32 %v993, %v1043
    %s1051 = scalar_lea.vmem %s1, 616
    %v1052 = vld [vmem:[%s1051] sm:$0xff]
    %v1053 = vld [vmem:[%s1051 + $0x8] sm:$0xff]
    %v1054 = vld [vmem:[%s1051 + $0x10] sm:$0xff]
    %v1055 = vld [vmem:[%s1051 + $0x18] sm:$0xff]
    %v1056 = vld [vmem:[%s1051 + $0x20] sm:$0xff]
    %v1057 = vld [vmem:[%s1051 + $0x28] sm:$0xff]
    %v1058 = vld [vmem:[%s1051 + $0x30] sm:$0x3]
    %1060 = vset.pattern.permute.xlu0 0
    %1061 = vperm.xlu0 %1060, %v1052
    %v1062 = vpop.permute.xlu0 %1061
    %1065 = vset.pattern.permute.xlu0 0
    %1066 = vperm.xlu0 %1065, %v1053
    %v1067 = vpop.permute.xlu0 %1066
    %1070 = vset.pattern.permute.xlu0 0
    %1071 = vperm.xlu0 %1070, %v1054
    %v1072 = vpop.permute.xlu0 %1071
    %1075 = vset.pattern.permute.xlu0 0
    %1076 = vperm.xlu0 %1075, %v1055
    %v1077 = vpop.permute.xlu0 %1076
    %1080 = vset.pattern.permute.xlu0 0
    %1081 = vperm.xlu0 %1080, %v1056
    %v1082 = vpop.permute.xlu0 %1081
    %1085 = vset.pattern.permute.xlu0 0
    %1086 = vperm.xlu0 %1085, %v1057
    %v1087 = vpop.permute.xlu0 %1086
    %1090 = vset.pattern.permute.xlu0 0
    %1091 = vperm.xlu0 %1090, %v1058
    %v1092 = vpop.permute.xlu0 %1091
    %v1094 = vmul.f32 %v1062, %v248
    %v1095 = vmul.f32 %v1067, %v248
    %v1096 = vmul.f32 %v1072, %v248
    %v1097 = vmul.f32 %v1077, %v248
    %v1098 = vmul.f32 %v1082, %v248
    %v1099 = vmul.f32 %v1087, %v248
    %v1100 = vmul.f32 %v1092, %v248
    %v1101 = vadd.f32 %v1044, %v1094
    %v1102 = vadd.f32 %v1045, %v1095
    %v1103 = vadd.f32 %v1046, %v1096
    %v1104 = vadd.f32 %v1047, %v1097
    %v1105 = vadd.f32 %v1048, %v1098
    %v1106 = vadd.f32 %v1049, %v1099
    %v1107 = vadd.f32 %v1050, %v1100
    %s1108 = scalar_lea.vmem %s3, 112
    %v1109 = vld [vmem:[%s1108] sm:$0xff]
    %v1110 = vld [vmem:[%s1108 + $0x8] sm:$0xff]
    %v1111 = vld [vmem:[%s1108 + $0x10] sm:$0xff]
    %v1112 = vld [vmem:[%s1108 + $0x18] sm:$0xff]
    %v1113 = vld [vmem:[%s1108 + $0x20] sm:$0xff]
    %v1114 = vld [vmem:[%s1108 + $0x28] sm:$0xff]
    %v1115 = vld [vmem:[%s1108 + $0x30] sm:$0x3]
    %1117 = vset.pattern.permute.xlu0 0
    %1118 = vperm.xlu0 %1117, %v1109
    %v1119 = vpop.permute.xlu0 %1118
    %1122 = vset.pattern.permute.xlu0 0
    %1123 = vperm.xlu0 %1122, %v1110
    %v1124 = vpop.permute.xlu0 %1123
    %1127 = vset.pattern.permute.xlu0 0
    %1128 = vperm.xlu0 %1127, %v1111
    %v1129 = vpop.permute.xlu0 %1128
    %1132 = vset.pattern.permute.xlu0 0
    %1133 = vperm.xlu0 %1132, %v1112
    %v1134 = vpop.permute.xlu0 %1133
    %1137 = vset.pattern.permute.xlu0 0
    %1138 = vperm.xlu0 %1137, %v1113
    %v1139 = vpop.permute.xlu0 %1138
    %1142 = vset.pattern.permute.xlu0 0
    %1143 = vperm.xlu0 %1142, %v1114
    %v1144 = vpop.permute.xlu0 %1143
    %1147 = vset.pattern.permute.xlu0 0
    %1148 = vperm.xlu0 %1147, %v1115
    %v1149 = vpop.permute.xlu0 %1148
    %v1151 = vadd.f32 %v1101, %v1119
    %v1152 = vadd.f32 %v1102, %v1124
    %v1153 = vadd.f32 %v1103, %v1129
    %v1154 = vadd.f32 %v1104, %v1134
    %v1155 = vadd.f32 %v1105, %v1139
    %v1156 = vadd.f32 %v1106, %v1144
    %v1157 = vadd.f32 %v1107, %v1149
    %s1158 = scalar_lea.vmem %s2, 56
    %v1159 = vld [vmem:[%s1158] sm:$0xff]
    %v1160 = vld [vmem:[%s1158 + $0x8] sm:$0xff]
    %v1161 = vld [vmem:[%s1158 + $0x10] sm:$0xff]
    %v1162 = vld [vmem:[%s1158 + $0x18] sm:$0xff]
    %v1163 = vld [vmem:[%s1158 + $0x20] sm:$0xff]
    %v1164 = vld [vmem:[%s1158 + $0x28] sm:$0xff]
    %v1165 = vld [vmem:[%s1158 + $0x30] sm:$0x3]
    %v1167 = vsel %vm676, %v1159, 0
    %v1170 = vsel %vm676, %v1160, 0
    %v1173 = vsel %vm676, %v1161, 0
    %v1176 = vsel %vm676, %v1162, 0
    %v1179 = vsel %vm676, %v1163, 0
    %v1182 = vsel %vm676, %v1164, 0
    %v1185 = vsel %vm676, %v1165, 0
    %v1188 = vsel %vm698, %v829, 0
    %1190 = vmatprep.subr.mxu0 0.0
    %1191 = vmatpush1.msra.mxu0 0.0
    %1192 = vmatprep.subr.mxu0 0.0
    %1193 = vmatpush1.msra.mxu0 0.0
    %1194 = vmatprep.subr.mxu0 0.0
    %1195 = vmatpush1.msra.mxu0 0.0
    %1196 = vmatprep.subr.mxu0 0.0
    %1197 = vmatpush1.msra.mxu0 0.0
    %1198 = vmatprep.subr.mxu0 0.0
    %1199 = vmatpush1.msra.mxu0 0.0
    %1200 = vmatprep.subr.mxu0 0.0
    %1201 = vmatpush1.msra.mxu0 0.0
    %1202 = vmatprep.subr.mxu0 0.0
    %1203 = vmatpush1.msra.mxu0 0.0
    %1204 = vmatprep.subr.mxu0 0.0
    %1205 = vmatpush1.msra.mxu0 0.0
    %1206 = vmatprep.subr.mxu0 0.0
    %1207 = vmatpush1.msra.mxu0 0.0
    %1208 = vmatprep.subr.mxu0 0.0
    %1209 = vmatpush1.msra.mxu0 %v1188
    %1210 = vmatprep.subr.mxu0 0.0
    %1211 = vmatpush1.msra.mxu0 %v828
    %1212 = vmatprep.subr.mxu0 0.0
    %1213 = vmatpush1.msra.mxu0 %v827
    %1214 = vmatprep.subr.mxu0 0.0
    %1215 = vmatpush1.msra.mxu0 %v826
    %1216 = vmatprep.subr.mxu0 0.0
    %1217 = vmatpush1.msra.mxu0 %v825
    %1218 = vmatprep.subr.mxu0 0.0
    %1219 = vmatpush1.msra.mxu0 %v824
    %1220 = vmatprep.subr.mxu0 0.0
    %1221 = vmatpush1.msra.mxu0 %v823
    %1222 = vmatprep.subr.mxu0 0.0
    %1223 = vmatpush2.msra.mxu0 0.0
    %1224 = vmatprep.subr.mxu0 0.0
    %1225 = vmatpush2.msra.mxu0 0.0
    %1226 = vmatprep.subr.mxu0 0.0
    %1227 = vmatpush2.msra.mxu0 0.0
    %1228 = vmatprep.subr.mxu0 0.0
    %1229 = vmatpush2.msra.mxu0 0.0
    %1230 = vmatprep.subr.mxu0 0.0
    %1231 = vmatpush2.msra.mxu0 0.0
    %1232 = vmatprep.subr.mxu0 0.0
    %1233 = vmatpush2.msra.mxu0 0.0
    %1234 = vmatprep.subr.mxu0 0.0
    %1235 = vmatpush2.msra.mxu0 0.0
    %1236 = vmatprep.subr.mxu0 0.0
    %1237 = vmatpush2.msra.mxu0 0.0
    %1238 = vmatprep.subr.mxu0 0.0
    %1239 = vmatpush2.msra.mxu0 0.0
    %1240 = vmatprep.subr.mxu0 0.0
    %1241 = vmatpush2.msra.mxu0 0.0
    %1242 = vmatprep.subr.mxu0 0.0
    %1243 = vmatpush2.msra.mxu0 0.0
    %1244 = vmatprep.subr.mxu0 0.0
    %1245 = vmatpush2.msra.mxu0 0.0
    %1246 = vmatprep.subr.mxu0 0.0
    %1247 = vmatpush2.msra.mxu0 0.0
    %1248 = vmatprep.subr.mxu0 0.0
    %1249 = vmatpush2.msra.mxu0 0.0
    %1250 = vmatprep.subr.mxu0 0.0
    %1251 = vmatpush2.msra.mxu0 0.0
    %1252 = vmatprep.subr.mxu0 0.0
    %1253 = vmatpush2.msra.mxu0 0.0
    %1254 = vmatprep.mubr.f32.mxu0 0.0
    %1255 = vmatmul.mubr.f32.gmra.mxu0 %v1167
    %v1256 = vpop.f32.mrf.mxu0
    %v1257 = vadd.f32 0.0, %v1256
    %v1258 = vpop.f32.mrf.mxu0
    %1259 = vmatprep.mubr.f32.mxu0 0.0
    %1260 = vmatmul.mubr.f32.gmra.mxu0 %v1170
    %v1261 = vpop.f32.mrf.mxu0
    %v1262 = vadd.f32 0.0, %v1261
    %v1263 = vpop.f32.mrf.mxu0
    %1264 = vmatprep.mubr.f32.mxu0 0.0
    %1265 = vmatmul.mubr.f32.gmra.mxu0 %v1173
    %v1266 = vpop.f32.mrf.mxu0
    %v1267 = vadd.f32 0.0, %v1266
    %v1268 = vpop.f32.mrf.mxu0
    %1269 = vmatprep.mubr.f32.mxu0 0.0
    %1270 = vmatmul.mubr.f32.gmra.mxu0 %v1176
    %v1271 = vpop.f32.mrf.mxu0
    %v1272 = vadd.f32 0.0, %v1271
    %v1273 = vpop.f32.mrf.mxu0
    %1274 = vmatprep.mubr.f32.mxu0 0.0
    %1275 = vmatmul.mubr.f32.gmra.mxu0 %v1179
    %v1276 = vpop.f32.mrf.mxu0
    %v1277 = vadd.f32 0.0, %v1276
    %v1278 = vpop.f32.mrf.mxu0
    %1279 = vmatprep.mubr.f32.mxu0 0.0
    %1280 = vmatmul.mubr.f32.gmra.mxu0 %v1182
    %v1281 = vpop.f32.mrf.mxu0
    %v1282 = vadd.f32 0.0, %v1281
    %v1283 = vpop.f32.mrf.mxu0
    %1284 = vmatprep.mubr.f32.mxu0 0.0
    %1285 = vmatmul.mubr.f32.gmra.mxu0 %v1185
    %v1286 = vpop.f32.mrf.mxu0
    %v1287 = vadd.f32 0.0, %v1286
    %v1288 = vpop.f32.mrf.mxu0
    %1289 = vdwg.mxu0
    %v1290 = vadd.f32 %v1151, %v1257
    %v1291 = vadd.f32 %v1152, %v1262
    %v1292 = vadd.f32 %v1153, %v1267
    %v1293 = vadd.f32 %v1154, %v1272
    %v1294 = vadd.f32 %v1155, %v1277
    %v1295 = vadd.f32 %v1156, %v1282
    %v1296 = vadd.f32 %v1157, %v1287
    %vm1297 = vcmp.ge.f32.partialorder %v1290, 0.0
    %vm1298 = vcmp.ge.f32.partialorder %v1291, 0.0
    %vm1299 = vcmp.ge.f32.partialorder %v1292, 0.0
    %vm1300 = vcmp.ge.f32.partialorder %v1293, 0.0
    %vm1301 = vcmp.ge.f32.partialorder %v1294, 0.0
    %vm1302 = vcmp.ge.f32.partialorder %v1295, 0.0
    %vm1303 = vcmp.ge.f32.partialorder %v1296, 0.0
    %v1304 = vmul.f32 %v1290, 0.01
    %v1305 = vmul.f32 %v1291, 0.01
    %v1306 = vmul.f32 %v1292, 0.01
    %v1307 = vmul.f32 %v1293, 0.01
    %v1308 = vmul.f32 %v1294, 0.01
    %v1309 = vmul.f32 %v1295, 0.01
    %v1310 = vmul.f32 %v1296, 0.01
    %v1311 = vsel %vm1297, %v1290, %v1304
    %v1312 = vsel %vm1298, %v1291, %v1305
    %v1313 = vsel %vm1299, %v1292, %v1306
    %v1314 = vsel %vm1300, %v1293, %v1307
    %v1315 = vsel %vm1301, %v1294, %v1308
    %v1316 = vsel %vm1302, %v1295, %v1309
    %v1317 = vsel %vm1303, %v1296, %v1310
    %s1318 = scalar_lea.vmem %s4, 112
    %v1319 = vld [vmem:[%s1318] sm:$0xff]
    %v1320 = vld [vmem:[%s1318 + $0x8] sm:$0xff]
    %v1321 = vld [vmem:[%s1318 + $0x10] sm:$0xff]
    %v1322 = vld [vmem:[%s1318 + $0x18] sm:$0xff]
    %v1323 = vld [vmem:[%s1318 + $0x20] sm:$0xff]
    %v1324 = vld [vmem:[%s1318 + $0x28] sm:$0xff]
    %v1325 = vld [vmem:[%s1318 + $0x30] sm:$0x3]
    %1327 = vset.pattern.permute.xlu0 0
    %1328 = vperm.xlu0 %1327, %v1319
    %v1329 = vpop.permute.xlu0 %1328
    %1332 = vset.pattern.permute.xlu0 0
    %1333 = vperm.xlu0 %1332, %v1320
    %v1334 = vpop.permute.xlu0 %1333
    %1337 = vset.pattern.permute.xlu0 0
    %1338 = vperm.xlu0 %1337, %v1321
    %v1339 = vpop.permute.xlu0 %1338
    %1342 = vset.pattern.permute.xlu0 0
    %1343 = vperm.xlu0 %1342, %v1322
    %v1344 = vpop.permute.xlu0 %1343
    %1347 = vset.pattern.permute.xlu0 0
    %1348 = vperm.xlu0 %1347, %v1323
    %v1349 = vpop.permute.xlu0 %1348
    %1352 = vset.pattern.permute.xlu0 0
    %1353 = vperm.xlu0 %1352, %v1324
    %v1354 = vpop.permute.xlu0 %1353
    %1357 = vset.pattern.permute.xlu0 0
    %1358 = vperm.xlu0 %1357, %v1325
    %v1359 = vpop.permute.xlu0 %1358
    %v1361 = vmul.f32 %v1311, %v1329
    %v1362 = vmul.f32 %v1312, %v1334
    %v1363 = vmul.f32 %v1313, %v1339
    %v1364 = vmul.f32 %v1314, %v1344
    %v1365 = vmul.f32 %v1315, %v1349
    %v1366 = vmul.f32 %v1316, %v1354
    %v1367 = vmul.f32 %v1317, %v1359
    %v1368 = vadd.f32 %v880, %v1361
    %v1369 = vadd.f32 %v881, %v1362
    %v1370 = vadd.f32 %v882, %v1363
    %v1371 = vadd.f32 %v883, %v1364
    %v1372 = vadd.f32 %v884, %v1365
    %v1373 = vadd.f32 %v885, %v1366
    %v1374 = vadd.f32 %v886, %v1367
    %s1375 = scalar_lea.vmem %s1, 672
    %v1376 = vld [vmem:[%s1375] sm:$0xff]
    %v1377 = vld [vmem:[%s1375 + $0x8] sm:$0xff]
    %v1378 = vld [vmem:[%s1375 + $0x10] sm:$0xff]
    %v1379 = vld [vmem:[%s1375 + $0x18] sm:$0xff]
    %v1380 = vld [vmem:[%s1375 + $0x20] sm:$0xff]
    %v1381 = vld [vmem:[%s1375 + $0x28] sm:$0xff]
    %v1382 = vld [vmem:[%s1375 + $0x30] sm:$0x3]
    %1384 = vset.pattern.permute.xlu0 0
    %1385 = vperm.xlu0 %1384, %v1376
    %v1386 = vpop.permute.xlu0 %1385
    %1389 = vset.pattern.permute.xlu0 0
    %1390 = vperm.xlu0 %1389, %v1377
    %v1391 = vpop.permute.xlu0 %1390
    %1394 = vset.pattern.permute.xlu0 0
    %1395 = vperm.xlu0 %1394, %v1378
    %v1396 = vpop.permute.xlu0 %1395
    %1399 = vset.pattern.permute.xlu0 0
    %1400 = vperm.xlu0 %1399, %v1379
    %v1401 = vpop.permute.xlu0 %1400
    %1404 = vset.pattern.permute.xlu0 0
    %1405 = vperm.xlu0 %1404, %v1380
    %v1406 = vpop.permute.xlu0 %1405
    %1409 = vset.pattern.permute.xlu0 0
    %1410 = vperm.xlu0 %1409, %v1381
    %v1411 = vpop.permute.xlu0 %1410
    %1414 = vset.pattern.permute.xlu0 0
    %1415 = vperm.xlu0 %1414, %v1382
    %v1416 = vpop.permute.xlu0 %1415
    %v1418 = vmul.f32 %v1386, %v428
    %v1419 = vmul.f32 %v1391, %v428
    %v1420 = vmul.f32 %v1396, %v428
    %v1421 = vmul.f32 %v1401, %v428
    %v1422 = vmul.f32 %v1406, %v428
    %v1423 = vmul.f32 %v1411, %v428
    %v1424 = vmul.f32 %v1416, %v428
    %s1425 = scalar_lea.vmem %s1, 728
    %v1426 = vld [vmem:[%s1425] sm:$0xff]
    %v1427 = vld [vmem:[%s1425 + $0x8] sm:$0xff]
    %v1428 = vld [vmem:[%s1425 + $0x10] sm:$0xff]
    %v1429 = vld [vmem:[%s1425 + $0x18] sm:$0xff]
    %v1430 = vld [vmem:[%s1425 + $0x20] sm:$0xff]
    %v1431 = vld [vmem:[%s1425 + $0x28] sm:$0xff]
    %v1432 = vld [vmem:[%s1425 + $0x30] sm:$0x3]
    %1434 = vset.pattern.permute.xlu0 0
    %1435 = vperm.xlu0 %1434, %v1426
    %v1436 = vpop.permute.xlu0 %1435
    %1439 = vset.pattern.permute.xlu0 0
    %1440 = vperm.xlu0 %1439, %v1427
    %v1441 = vpop.permute.xlu0 %1440
    %1444 = vset.pattern.permute.xlu0 0
    %1445 = vperm.xlu0 %1444, %v1428
    %v1446 = vpop.permute.xlu0 %1445
    %1449 = vset.pattern.permute.xlu0 0
    %1450 = vperm.xlu0 %1449, %v1429
    %v1451 = vpop.permute.xlu0 %1450
    %1454 = vset.pattern.permute.xlu0 0
    %1455 = vperm.xlu0 %1454, %v1430
    %v1456 = vpop.permute.xlu0 %1455
    %1459 = vset.pattern.permute.xlu0 0
    %1460 = vperm.xlu0 %1459, %v1431
    %v1461 = vpop.permute.xlu0 %1460
    %1464 = vset.pattern.permute.xlu0 0
    %1465 = vperm.xlu0 %1464, %v1432
    %v1466 = vpop.permute.xlu0 %1465
    %v1468 = vmul.f32 %v1436, %v482
    %v1469 = vmul.f32 %v1441, %v482
    %v1470 = vmul.f32 %v1446, %v482
    %v1471 = vmul.f32 %v1451, %v482
    %v1472 = vmul.f32 %v1456, %v482
    %v1473 = vmul.f32 %v1461, %v482
    %v1474 = vmul.f32 %v1466, %v482
    %v1475 = vadd.f32 %v1418, %v1468
    %v1476 = vadd.f32 %v1419, %v1469
    %v1477 = vadd.f32 %v1420, %v1470
    %v1478 = vadd.f32 %v1421, %v1471
    %v1479 = vadd.f32 %v1422, %v1472
    %v1480 = vadd.f32 %v1423, %v1473
    %v1481 = vadd.f32 %v1424, %v1474
    %s1482 = scalar_lea.vmem %s1, 784
    %v1483 = vld [vmem:[%s1482] sm:$0xff]
    %v1484 = vld [vmem:[%s1482 + $0x8] sm:$0xff]
    %v1485 = vld [vmem:[%s1482 + $0x10] sm:$0xff]
    %v1486 = vld [vmem:[%s1482 + $0x18] sm:$0xff]
    %v1487 = vld [vmem:[%s1482 + $0x20] sm:$0xff]
    %v1488 = vld [vmem:[%s1482 + $0x28] sm:$0xff]
    %v1489 = vld [vmem:[%s1482 + $0x30] sm:$0x3]
    %1491 = vset.pattern.permute.xlu0 0
    %1492 = vperm.xlu0 %1491, %v1483
    %v1493 = vpop.permute.xlu0 %1492
    %1496 = vset.pattern.permute.xlu0 0
    %1497 = vperm.xlu0 %1496, %v1484
    %v1498 = vpop.permute.xlu0 %1497
    %1501 = vset.pattern.permute.xlu0 0
    %1502 = vperm.xlu0 %1501, %v1485
    %v1503 = vpop.permute.xlu0 %1502
    %1506 = vset.pattern.permute.xlu0 0
    %1507 = vperm.xlu0 %1506, %v1486
    %v1508 = vpop.permute.xlu0 %1507
    %1511 = vset.pattern.permute.xlu0 0
    %1512 = vperm.xlu0 %1511, %v1487
    %v1513 = vpop.permute.xlu0 %1512
    %1516 = vset.pattern.permute.xlu0 0
    %1517 = vperm.xlu0 %1516, %v1488
    %v1518 = vpop.permute.xlu0 %1517
    %1521 = vset.pattern.permute.xlu0 0
    %1522 = vperm.xlu0 %1521, %v1489
    %v1523 = vpop.permute.xlu0 %1522
    %v1525 = vmul.f32 %v1493, %v543
    %v1526 = vmul.f32 %v1498, %v543
    %v1527 = vmul.f32 %v1503, %v543
    %v1528 = vmul.f32 %v1508, %v543
    %v1529 = vmul.f32 %v1513, %v543
    %v1530 = vmul.f32 %v1518, %v543
    %v1531 = vmul.f32 %v1523, %v543
    %v1532 = vadd.f32 %v1475, %v1525
    %v1533 = vadd.f32 %v1476, %v1526
    %v1534 = vadd.f32 %v1477, %v1527
    %v1535 = vadd.f32 %v1478, %v1528
    %v1536 = vadd.f32 %v1479, %v1529
    %v1537 = vadd.f32 %v1480, %v1530
    %v1538 = vadd.f32 %v1481, %v1531
    %s1539 = scalar_lea.vmem %s1, 840
    %v1540 = vld [vmem:[%s1539] sm:$0xff]
    %v1541 = vld [vmem:[%s1539 + $0x8] sm:$0xff]
    %v1542 = vld [vmem:[%s1539 + $0x10] sm:$0xff]
    %v1543 = vld [vmem:[%s1539 + $0x18] sm:$0xff]
    %v1544 = vld [vmem:[%s1539 + $0x20] sm:$0xff]
    %v1545 = vld [vmem:[%s1539 + $0x28] sm:$0xff]
    %v1546 = vld [vmem:[%s1539 + $0x30] sm:$0x3]
    %1548 = vset.pattern.permute.xlu0 0
    %1549 = vperm.xlu0 %1548, %v1540
    %v1550 = vpop.permute.xlu0 %1549
    %1553 = vset.pattern.permute.xlu0 0
    %1554 = vperm.xlu0 %1553, %v1541
    %v1555 = vpop.permute.xlu0 %1554
    %1558 = vset.pattern.permute.xlu0 0
    %1559 = vperm.xlu0 %1558, %v1542
    %v1560 = vpop.permute.xlu0 %1559
    %1563 = vset.pattern.permute.xlu0 0
    %1564 = vperm.xlu0 %1563, %v1543
    %v1565 = vpop.permute.xlu0 %1564
    %1568 = vset.pattern.permute.xlu0 0
    %1569 = vperm.xlu0 %1568, %v1544
    %v1570 = vpop.permute.xlu0 %1569
    %1573 = vset.pattern.permute.xlu0 0
    %1574 = vperm.xlu0 %1573, %v1545
    %v1575 = vpop.permute.xlu0 %1574
    %1578 = vset.pattern.permute.xlu0 0
    %1579 = vperm.xlu0 %1578, %v1546
    %v1580 = vpop.permute.xlu0 %1579
    %v1582 = vmul.f32 %v1550, %v604
    %v1583 = vmul.f32 %v1555, %v604
    %v1584 = vmul.f32 %v1560, %v604
    %v1585 = vmul.f32 %v1565, %v604
    %v1586 = vmul.f32 %v1570, %v604
    %v1587 = vmul.f32 %v1575, %v604
    %v1588 = vmul.f32 %v1580, %v604
    %v1589 = vadd.f32 %v1532, %v1582
    %v1590 = vadd.f32 %v1533, %v1583
    %v1591 = vadd.f32 %v1534, %v1584
    %v1592 = vadd.f32 %v1535, %v1585
    %v1593 = vadd.f32 %v1536, %v1586
    %v1594 = vadd.f32 %v1537, %v1587
    %v1595 = vadd.f32 %v1538, %v1588
    %s1596 = scalar_lea.vmem %s3, 168
    %v1597 = vld [vmem:[%s1596] sm:$0xff]
    %v1598 = vld [vmem:[%s1596 + $0x8] sm:$0xff]
    %v1599 = vld [vmem:[%s1596 + $0x10] sm:$0xff]
    %v1600 = vld [vmem:[%s1596 + $0x18] sm:$0xff]
    %v1601 = vld [vmem:[%s1596 + $0x20] sm:$0xff]
    %v1602 = vld [vmem:[%s1596 + $0x28] sm:$0xff]
    %v1603 = vld [vmem:[%s1596 + $0x30] sm:$0x3]
    %1605 = vset.pattern.permute.xlu0 0
    %1606 = vperm.xlu0 %1605, %v1597
    %v1607 = vpop.permute.xlu0 %1606
    %1610 = vset.pattern.permute.xlu0 0
    %1611 = vperm.xlu0 %1610, %v1598
    %v1612 = vpop.permute.xlu0 %1611
    %1615 = vset.pattern.permute.xlu0 0
    %1616 = vperm.xlu0 %1615, %v1599
    %v1617 = vpop.permute.xlu0 %1616
    %1620 = vset.pattern.permute.xlu0 0
    %1621 = vperm.xlu0 %1620, %v1600
    %v1622 = vpop.permute.xlu0 %1621
    %1625 = vset.pattern.permute.xlu0 0
    %1626 = vperm.xlu0 %1625, %v1601
    %v1627 = vpop.permute.xlu0 %1626
    %1630 = vset.pattern.permute.xlu0 0
    %1631 = vperm.xlu0 %1630, %v1602
    %v1632 = vpop.permute.xlu0 %1631
    %1635 = vset.pattern.permute.xlu0 0
    %1636 = vperm.xlu0 %1635, %v1603
    %v1637 = vpop.permute.xlu0 %1636
    %v1639 = vadd.f32 %v1589, %v1607
    %v1640 = vadd.f32 %v1590, %v1612
    %v1641 = vadd.f32 %v1591, %v1617
    %v1642 = vadd.f32 %v1592, %v1622
    %v1643 = vadd.f32 %v1593, %v1627
    %v1644 = vadd.f32 %v1594, %v1632
    %v1645 = vadd.f32 %v1595, %v1637
    %s1646 = scalar_lea.vmem %s2, 112
    %v1647 = vld [vmem:[%s1646] sm:$0xff]
    %v1648 = vld [vmem:[%s1646 + $0x8] sm:$0xff]
    %v1649 = vld [vmem:[%s1646 + $0x10] sm:$0xff]
    %v1650 = vld [vmem:[%s1646 + $0x18] sm:$0xff]
    %v1651 = vld [vmem:[%s1646 + $0x20] sm:$0xff]
    %v1652 = vld [vmem:[%s1646 + $0x28] sm:$0xff]
    %v1653 = vld [vmem:[%s1646 + $0x30] sm:$0x3]
    %v1655 = vsel %vm676, %v1647, 0
    %v1658 = vsel %vm676, %v1648, 0
    %v1661 = vsel %vm676, %v1649, 0
    %v1664 = vsel %vm676, %v1650, 0
    %v1667 = vsel %vm676, %v1651, 0
    %v1670 = vsel %vm676, %v1652, 0
    %v1673 = vsel %vm676, %v1653, 0
    %v1676 = vsel %vm698, %v1317, 0
    %1678 = vmatprep.subr.mxu0 0.0
    %1679 = vmatpush1.msra.mxu0 0.0
    %1680 = vmatprep.subr.mxu0 0.0
    %1681 = vmatpush1.msra.mxu0 0.0
    %1682 = vmatprep.subr.mxu0 0.0
    %1683 = vmatpush1.msra.mxu0 0.0
    %1684 = vmatprep.subr.mxu0 0.0
    %1685 = vmatpush1.msra.mxu0 0.0
    %1686 = vmatprep.subr.mxu0 0.0
    %1687 = vmatpush1.msra.mxu0 0.0
    %1688 = vmatprep.subr.mxu0 0.0
    %1689 = vmatpush1.msra.mxu0 0.0
    %1690 = vmatprep.subr.mxu0 0.0
    %1691 = vmatpush1.msra.mxu0 0.0
    %1692 = vmatprep.subr.mxu0 0.0
    %1693 = vmatpush1.msra.mxu0 0.0
    %1694 = vmatprep.subr.mxu0 0.0
    %1695 = vmatpush1.msra.mxu0 0.0
    %1696 = vmatprep.subr.mxu0 0.0
    %1697 = vmatpush1.msra.mxu0 %v1676
    %1698 = vmatprep.subr.mxu0 0.0
    %1699 = vmatpush1.msra.mxu0 %v1316
    %1700 = vmatprep.subr.mxu0 0.0
    %1701 = vmatpush1.msra.mxu0 %v1315
    %1702 = vmatprep.subr.mxu0 0.0
    %1703 = vmatpush1.msra.mxu0 %v1314
    %1704 = vmatprep.subr.mxu0 0.0
    %1705 = vmatpush1.msra.mxu0 %v1313
    %1706 = vmatprep.subr.mxu0 0.0
    %1707 = vmatpush1.msra.mxu0 %v1312
    %1708 = vmatprep.subr.mxu0 0.0
    %1709 = vmatpush1.msra.mxu0 %v1311
    %1710 = vmatprep.subr.mxu0 0.0
    %1711 = vmatpush2.msra.mxu0 0.0
    %1712 = vmatprep.subr.mxu0 0.0
    %1713 = vmatpush2.msra.mxu0 0.0
    %1714 = vmatprep.subr.mxu0 0.0
    %1715 = vmatpush2.msra.mxu0 0.0
    %1716 = vmatprep.subr.mxu0 0.0
    %1717 = vmatpush2.msra.mxu0 0.0
    %1718 = vmatprep.subr.mxu0 0.0
    %1719 = vmatpush2.msra.mxu0 0.0
    %1720 = vmatprep.subr.mxu0 0.0
    %1721 = vmatpush2.msra.mxu0 0.0
    %1722 = vmatprep.subr.mxu0 0.0
    %1723 = vmatpush2.msra.mxu0 0.0
    %1724 = vmatprep.subr.mxu0 0.0
    %1725 = vmatpush2.msra.mxu0 0.0
    %1726 = vmatprep.subr.mxu0 0.0
    %1727 = vmatpush2.msra.mxu0 0.0
    %1728 = vmatprep.subr.mxu0 0.0
    %1729 = vmatpush2.msra.mxu0 0.0
    %1730 = vmatprep.subr.mxu0 0.0
    %1731 = vmatpush2.msra.mxu0 0.0
    %1732 = vmatprep.subr.mxu0 0.0
    %1733 = vmatpush2.msra.mxu0 0.0
    %1734 = vmatprep.subr.mxu0 0.0
    %1735 = vmatpush2.msra.mxu0 0.0
    %1736 = vmatprep.subr.mxu0 0.0
    %1737 = vmatpush2.msra.mxu0 0.0
    %1738 = vmatprep.subr.mxu0 0.0
    %1739 = vmatpush2.msra.mxu0 0.0
    %1740 = vmatprep.subr.mxu0 0.0
    %1741 = vmatpush2.msra.mxu0 0.0
    %1742 = vmatprep.mubr.f32.mxu0 0.0
    %1743 = vmatmul.mubr.f32.gmra.mxu0 %v1655
    %v1744 = vpop.f32.mrf.mxu0
    %v1745 = vadd.f32 0.0, %v1744
    %v1746 = vpop.f32.mrf.mxu0
    %1747 = vmatprep.mubr.f32.mxu0 0.0
    %1748 = vmatmul.mubr.f32.gmra.mxu0 %v1658
    %v1749 = vpop.f32.mrf.mxu0
    %v1750 = vadd.f32 0.0, %v1749
    %v1751 = vpop.f32.mrf.mxu0
    %1752 = vmatprep.mubr.f32.mxu0 0.0
    %1753 = vmatmul.mubr.f32.gmra.mxu0 %v1661
    %v1754 = vpop.f32.mrf.mxu0
    %v1755 = vadd.f32 0.0, %v1754
    %v1756 = vpop.f32.mrf.mxu0
    %1757 = vmatprep.mubr.f32.mxu0 0.0
    %1758 = vmatmul.mubr.f32.gmra.mxu0 %v1664
    %v1759 = vpop.f32.mrf.mxu0
    %v1760 = vadd.f32 0.0, %v1759
    %v1761 = vpop.f32.mrf.mxu0
    %1762 = vmatprep.mubr.f32.mxu0 0.0
    %1763 = vmatmul.mubr.f32.gmra.mxu0 %v1667
    %v1764 = vpop.f32.mrf.mxu0
    %v1765 = vadd.f32 0.0, %v1764
    %v1766 = vpop.f32.mrf.mxu0
    %1767 = vmatprep.mubr.f32.mxu0 0.0
    %1768 = vmatmul.mubr.f32.gmra.mxu0 %v1670
    %v1769 = vpop.f32.mrf.mxu0
    %v1770 = vadd.f32 0.0, %v1769
    %v1771 = vpop.f32.mrf.mxu0
    %1772 = vmatprep.mubr.f32.mxu0 0.0
    %1773 = vmatmul.mubr.f32.gmra.mxu0 %v1673
    %v1774 = vpop.f32.mrf.mxu0
    %v1775 = vadd.f32 0.0, %v1774
    %v1776 = vpop.f32.mrf.mxu0
    %1777 = vdwg.mxu0
    %v1778 = vadd.f32 %v1639, %v1745
    %v1779 = vadd.f32 %v1640, %v1750
    %v1780 = vadd.f32 %v1641, %v1755
    %v1781 = vadd.f32 %v1642, %v1760
    %v1782 = vadd.f32 %v1643, %v1765
    %v1783 = vadd.f32 %v1644, %v1770
    %v1784 = vadd.f32 %v1645, %v1775
    %vm1785 = vcmp.ge.f32.partialorder %v1778, 0.0
    %vm1786 = vcmp.ge.f32.partialorder %v1779, 0.0
    %vm1787 = vcmp.ge.f32.partialorder %v1780, 0.0
    %vm1788 = vcmp.ge.f32.partialorder %v1781, 0.0
    %vm1789 = vcmp.ge.f32.partialorder %v1782, 0.0
    %vm1790 = vcmp.ge.f32.partialorder %v1783, 0.0
    %vm1791 = vcmp.ge.f32.partialorder %v1784, 0.0
    %v1792 = vmul.f32 %v1778, 0.01
    %v1793 = vmul.f32 %v1779, 0.01
    %v1794 = vmul.f32 %v1780, 0.01
    %v1795 = vmul.f32 %v1781, 0.01
    %v1796 = vmul.f32 %v1782, 0.01
    %v1797 = vmul.f32 %v1783, 0.01
    %v1798 = vmul.f32 %v1784, 0.01
    %v1799 = vsel %vm1785, %v1778, %v1792
    %v1800 = vsel %vm1786, %v1779, %v1793
    %v1801 = vsel %vm1787, %v1780, %v1794
    %v1802 = vsel %vm1788, %v1781, %v1795
    %v1803 = vsel %vm1789, %v1782, %v1796
    %v1804 = vsel %vm1790, %v1783, %v1797
    %v1805 = vsel %vm1791, %v1784, %v1798
    %s1806 = scalar_lea.vmem %s4, 168
    %v1807 = vld [vmem:[%s1806] sm:$0xff]
    %v1808 = vld [vmem:[%s1806 + $0x8] sm:$0xff]
    %v1809 = vld [vmem:[%s1806 + $0x10] sm:$0xff]
    %v1810 = vld [vmem:[%s1806 + $0x18] sm:$0xff]
    %v1811 = vld [vmem:[%s1806 + $0x20] sm:$0xff]
    %v1812 = vld [vmem:[%s1806 + $0x28] sm:$0xff]
    %v1813 = vld [vmem:[%s1806 + $0x30] sm:$0x3]
    %1815 = vset.pattern.permute.xlu0 0
    %1816 = vperm.xlu0 %1815, %v1807
    %v1817 = vpop.permute.xlu0 %1816
    %1820 = vset.pattern.permute.xlu0 0
    %1821 = vperm.xlu0 %1820, %v1808
    %v1822 = vpop.permute.xlu0 %1821
    %1825 = vset.pattern.permute.xlu0 0
    %1826 = vperm.xlu0 %1825, %v1809
    %v1827 = vpop.permute.xlu0 %1826
    %1830 = vset.pattern.permute.xlu0 0
    %1831 = vperm.xlu0 %1830, %v1810
    %v1832 = vpop.permute.xlu0 %1831
    %1835 = vset.pattern.permute.xlu0 0
    %1836 = vperm.xlu0 %1835, %v1811
    %v1837 = vpop.permute.xlu0 %1836
    %1840 = vset.pattern.permute.xlu0 0
    %1841 = vperm.xlu0 %1840, %v1812
    %v1842 = vpop.permute.xlu0 %1841
    %1845 = vset.pattern.permute.xlu0 0
    %1846 = vperm.xlu0 %1845, %v1813
    %v1847 = vpop.permute.xlu0 %1846
    %v1849 = vmul.f32 %v1799, %v1817
    %v1850 = vmul.f32 %v1800, %v1822
    %v1851 = vmul.f32 %v1801, %v1827
    %v1852 = vmul.f32 %v1802, %v1832
    %v1853 = vmul.f32 %v1803, %v1837
    %v1854 = vmul.f32 %v1804, %v1842
    %v1855 = vmul.f32 %v1805, %v1847
    %v1856 = vadd.f32 %v1368, %v1849
    %v1857 = vadd.f32 %v1369, %v1850
    %v1858 = vadd.f32 %v1370, %v1851
    %v1859 = vadd.f32 %v1371, %v1852
    %v1860 = vadd.f32 %v1372, %v1853
    %v1861 = vadd.f32 %v1373, %v1854
    %v1862 = vadd.f32 %v1374, %v1855
    %v1864 = vsel %vm698, %v1805, 0
    %1866 = vmatprep.subr.mxu0 0.0
    %1867 = vmatpush1.msra.mxu0 0.0
    %1868 = vmatprep.subr.mxu0 0.0
    %1869 = vmatpush1.msra.mxu0 0.0
    %1870 = vmatprep.subr.mxu0 0.0
    %1871 = vmatpush1.msra.mxu0 0.0
    %1872 = vmatprep.subr.mxu0 0.0
    %1873 = vmatpush1.msra.mxu0 0.0
    %1874 = vmatprep.subr.mxu0 0.0
    %1875 = vmatpush1.msra.mxu0 0.0
    %1876 = vmatprep.subr.mxu0 0.0
    %1877 = vmatpush1.msra.mxu0 0.0
    %1878 = vmatprep.subr.mxu0 0.0
    %1879 = vmatpush1.msra.mxu0 0.0
    %1880 = vmatprep.subr.mxu0 0.0
    %1881 = vmatpush1.msra.mxu0 0.0
    %1882 = vmatprep.subr.mxu0 0.0
    %1883 = vmatpush1.msra.mxu0 0.0
    %1884 = vmatprep.subr.mxu0 0.0
    %1885 = vmatpush1.msra.mxu0 %v1864
    %1886 = vmatprep.subr.mxu0 0.0
    %1887 = vmatpush1.msra.mxu0 %v1804
    %1888 = vmatprep.subr.mxu0 0.0
    %1889 = vmatpush1.msra.mxu0 %v1803
    %1890 = vmatprep.subr.mxu0 0.0
    %1891 = vmatpush1.msra.mxu0 %v1802
    %1892 = vmatprep.subr.mxu0 0.0
    %1893 = vmatpush1.msra.mxu0 %v1801
    %1894 = vmatprep.subr.mxu0 0.0
    %1895 = vmatpush1.msra.mxu0 %v1800
    %1896 = vmatprep.subr.mxu0 0.0
    %1897 = vmatpush1.msra.mxu0 %v1799
    %1898 = vmatprep.subr.mxu0 0.0
    %1899 = vmatpush2.msra.mxu0 0.0
    %1900 = vmatprep.subr.mxu0 0.0
    %1901 = vmatpush2.msra.mxu0 0.0
    %1902 = vmatprep.subr.mxu0 0.0
    %1903 = vmatpush2.msra.mxu0 0.0
    %1904 = vmatprep.subr.mxu0 0.0
    %1905 = vmatpush2.msra.mxu0 0.0
    %1906 = vmatprep.subr.mxu0 0.0
    %1907 = vmatpush2.msra.mxu0 0.0
    %1908 = vmatprep.subr.mxu0 0.0
    %1909 = vmatpush2.msra.mxu0 0.0
    %1910 = vmatprep.subr.mxu0 0.0
    %1911 = vmatpush2.msra.mxu0 0.0
    %1912 = vmatprep.subr.mxu0 0.0
    %1913 = vmatpush2.msra.mxu0 0.0
    %1914 = vmatprep.subr.mxu0 0.0
    %1915 = vmatpush2.msra.mxu0 0.0
    %1916 = vmatprep.subr.mxu0 0.0
    %1917 = vmatpush2.msra.mxu0 0.0
    %1918 = vmatprep.subr.mxu0 0.0
    %1919 = vmatpush2.msra.mxu0 0.0
    %1920 = vmatprep.subr.mxu0 0.0
    %1921 = vmatpush2.msra.mxu0 0.0
    %1922 = vmatprep.subr.mxu0 0.0
    %1923 = vmatpush2.msra.mxu0 0.0
    %1924 = vmatprep.subr.mxu0 0.0
    %1925 = vmatpush2.msra.mxu0 0.0
    %1926 = vmatprep.subr.mxu0 0.0
    %1927 = vmatpush2.msra.mxu0 0.0
    %1928 = vmatprep.subr.mxu0 0.0
    %1929 = vmatpush2.msra.mxu0 0.0
    %1930 = vmatprep.mubr.f32.mxu0 0.0
    %1931 = vmatmul.mubr.f32.gmra.mxu0 %v1167
    %v1932 = vpop.f32.mrf.mxu0
    %v1933 = vadd.f32 0.0, %v1932
    %v1934 = vpop.f32.mrf.mxu0
    %1935 = vmatprep.mubr.f32.mxu0 0.0
    %1936 = vmatmul.mubr.f32.gmra.mxu0 %v1170
    %v1937 = vpop.f32.mrf.mxu0
    %v1938 = vadd.f32 0.0, %v1937
    %v1939 = vpop.f32.mrf.mxu0
    %1940 = vmatprep.mubr.f32.mxu0 0.0
    %1941 = vmatmul.mubr.f32.gmra.mxu0 %v1173
    %v1942 = vpop.f32.mrf.mxu0
    %v1943 = vadd.f32 0.0, %v1942
    %v1944 = vpop.f32.mrf.mxu0
    %1945 = vmatprep.mubr.f32.mxu0 0.0
    %1946 = vmatmul.mubr.f32.gmra.mxu0 %v1176
    %v1947 = vpop.f32.mrf.mxu0
    %v1948 = vadd.f32 0.0, %v1947
    %v1949 = vpop.f32.mrf.mxu0
    %1950 = vmatprep.mubr.f32.mxu0 0.0
    %1951 = vmatmul.mubr.f32.gmra.mxu0 %v1179
    %v1952 = vpop.f32.mrf.mxu0
    %v1953 = vadd.f32 0.0, %v1952
    %v1954 = vpop.f32.mrf.mxu0
    %1955 = vmatprep.mubr.f32.mxu0 0.0
    %1956 = vmatmul.mubr.f32.gmra.mxu0 %v1182
    %v1957 = vpop.f32.mrf.mxu0
    %v1958 = vadd.f32 0.0, %v1957
    %v1959 = vpop.f32.mrf.mxu0
    %1960 = vmatprep.mubr.f32.mxu0 0.0
    %1961 = vmatmul.mubr.f32.gmra.mxu0 %v1185
    %v1962 = vpop.f32.mrf.mxu0
    %v1963 = vadd.f32 0.0, %v1962
    %v1964 = vpop.f32.mrf.mxu0
    %1965 = vdwg.mxu0
    %v1966 = vadd.f32 %v1151, %v1933
    %v1967 = vadd.f32 %v1152, %v1938
    %v1968 = vadd.f32 %v1153, %v1943
    %v1969 = vadd.f32 %v1154, %v1948
    %v1970 = vadd.f32 %v1155, %v1953
    %v1971 = vadd.f32 %v1156, %v1958
    %v1972 = vadd.f32 %v1157, %v1963
    %vm1973 = vcmp.ge.f32.partialorder %v1966, 0.0
    %vm1974 = vcmp.ge.f32.partialorder %v1967, 0.0
    %vm1975 = vcmp.ge.f32.partialorder %v1968, 0.0
    %vm1976 = vcmp.ge.f32.partialorder %v1969, 0.0
    %vm1977 = vcmp.ge.f32.partialorder %v1970, 0.0
    %vm1978 = vcmp.ge.f32.partialorder %v1971, 0.0
    %vm1979 = vcmp.ge.f32.partialorder %v1972, 0.0
    %v1980 = vmul.f32 %v1966, 0.01
    %v1981 = vmul.f32 %v1967, 0.01
    %v1982 = vmul.f32 %v1968, 0.01
    %v1983 = vmul.f32 %v1969, 0.01
    %v1984 = vmul.f32 %v1970, 0.01
    %v1985 = vmul.f32 %v1971, 0.01
    %v1986 = vmul.f32 %v1972, 0.01
    %v1987 = vsel %vm1973, %v1966, %v1980
    %v1988 = vsel %vm1974, %v1967, %v1981
    %v1989 = vsel %vm1975, %v1968, %v1982
    %v1990 = vsel %vm1976, %v1969, %v1983
    %v1991 = vsel %vm1977, %v1970, %v1984
    %v1992 = vsel %vm1978, %v1971, %v1985
    %v1993 = vsel %vm1979, %v1972, %v1986
    %s1994 = scalar_lea.vmem %s4, 224
    %v1995 = vld [vmem:[%s1994] sm:$0xff]
    %v1996 = vld [vmem:[%s1994 + $0x8] sm:$0xff]
    %v1997 = vld [vmem:[%s1994 + $0x10] sm:$0xff]
    %v1998 = vld [vmem:[%s1994 + $0x18] sm:$0xff]
    %v1999 = vld [vmem:[%s1994 + $0x20] sm:$0xff]
    %v2000 = vld [vmem:[%s1994 + $0x28] sm:$0xff]
    %v2001 = vld [vmem:[%s1994 + $0x30] sm:$0x3]
    %2003 = vset.pattern.permute.xlu0 0
    %2004 = vperm.xlu0 %2003, %v1995
    %v2005 = vpop.permute.xlu0 %2004
    %2008 = vset.pattern.permute.xlu0 0
    %2009 = vperm.xlu0 %2008, %v1996
    %v2010 = vpop.permute.xlu0 %2009
    %2013 = vset.pattern.permute.xlu0 0
    %2014 = vperm.xlu0 %2013, %v1997
    %v2015 = vpop.permute.xlu0 %2014
    %2018 = vset.pattern.permute.xlu0 0
    %2019 = vperm.xlu0 %2018, %v1998
    %v2020 = vpop.permute.xlu0 %2019
    %2023 = vset.pattern.permute.xlu0 0
    %2024 = vperm.xlu0 %2023, %v1999
    %v2025 = vpop.permute.xlu0 %2024
    %2028 = vset.pattern.permute.xlu0 0
    %2029 = vperm.xlu0 %2028, %v2000
    %v2030 = vpop.permute.xlu0 %2029
    %2033 = vset.pattern.permute.xlu0 0
    %2034 = vperm.xlu0 %2033, %v2001
    %v2035 = vpop.permute.xlu0 %2034
    %v2037 = vmul.f32 %v1987, %v2005
    %v2038 = vmul.f32 %v1988, %v2010
    %v2039 = vmul.f32 %v1989, %v2015
    %v2040 = vmul.f32 %v1990, %v2020
    %v2041 = vmul.f32 %v1991, %v2025
    %v2042 = vmul.f32 %v1992, %v2030
    %v2043 = vmul.f32 %v1993, %v2035
    %v2044 = vadd.f32 %v1856, %v2037
    %v2045 = vadd.f32 %v1857, %v2038
    %v2046 = vadd.f32 %v1858, %v2039
    %v2047 = vadd.f32 %v1859, %v2040
    %v2048 = vadd.f32 %v1860, %v2041
    %v2049 = vadd.f32 %v1861, %v2042
    %v2050 = vadd.f32 %v1862, %v2043
    %v2052 = vsel %vm698, %v1993, 0
    %2054 = vmatprep.subr.mxu0 0.0
    %2055 = vmatpush1.msra.mxu0 0.0
    %2056 = vmatprep.subr.mxu0 0.0
    %2057 = vmatpush1.msra.mxu0 0.0
    %2058 = vmatprep.subr.mxu0 0.0
    %2059 = vmatpush1.msra.mxu0 0.0
    %2060 = vmatprep.subr.mxu0 0.0
    %2061 = vmatpush1.msra.mxu0 0.0
    %2062 = vmatprep.subr.mxu0 0.0
    %2063 = vmatpush1.msra.mxu0 0.0
    %2064 = vmatprep.subr.mxu0 0.0
    %2065 = vmatpush1.msra.mxu0 0.0
    %2066 = vmatprep.subr.mxu0 0.0
    %2067 = vmatpush1.msra.mxu0 0.0
    %2068 = vmatprep.subr.mxu0 0.0
    %2069 = vmatpush1.msra.mxu0 0.0
    %2070 = vmatprep.subr.mxu0 0.0
    %2071 = vmatpush1.msra.mxu0 0.0
    %2072 = vmatprep.subr.mxu0 0.0
    %2073 = vmatpush1.msra.mxu0 %v2052
    %2074 = vmatprep.subr.mxu0 0.0
    %2075 = vmatpush1.msra.mxu0 %v1992
    %2076 = vmatprep.subr.mxu0 0.0
    %2077 = vmatpush1.msra.mxu0 %v1991
    %2078 = vmatprep.subr.mxu0 0.0
    %2079 = vmatpush1.msra.mxu0 %v1990
    %2080 = vmatprep.subr.mxu0 0.0
    %2081 = vmatpush1.msra.mxu0 %v1989
    %2082 = vmatprep.subr.mxu0 0.0
    %2083 = vmatpush1.msra.mxu0 %v1988
    %2084 = vmatprep.subr.mxu0 0.0
    %2085 = vmatpush1.msra.mxu0 %v1987
    %2086 = vmatprep.subr.mxu0 0.0
    %2087 = vmatpush2.msra.mxu0 0.0
    %2088 = vmatprep.subr.mxu0 0.0
    %2089 = vmatpush2.msra.mxu0 0.0
    %2090 = vmatprep.subr.mxu0 0.0
    %2091 = vmatpush2.msra.mxu0 0.0
    %2092 = vmatprep.subr.mxu0 0.0
    %2093 = vmatpush2.msra.mxu0 0.0
    %2094 = vmatprep.subr.mxu0 0.0
    %2095 = vmatpush2.msra.mxu0 0.0
    %2096 = vmatprep.subr.mxu0 0.0
    %2097 = vmatpush2.msra.mxu0 0.0
    %2098 = vmatprep.subr.mxu0 0.0
    %2099 = vmatpush2.msra.mxu0 0.0
    %2100 = vmatprep.subr.mxu0 0.0
    %2101 = vmatpush2.msra.mxu0 0.0
    %2102 = vmatprep.subr.mxu0 0.0
    %2103 = vmatpush2.msra.mxu0 0.0
    %2104 = vmatprep.subr.mxu0 0.0
    %2105 = vmatpush2.msra.mxu0 0.0
    %2106 = vmatprep.subr.mxu0 0.0
    %2107 = vmatpush2.msra.mxu0 0.0
    %2108 = vmatprep.subr.mxu0 0.0
    %2109 = vmatpush2.msra.mxu0 0.0
    %2110 = vmatprep.subr.mxu0 0.0
    %2111 = vmatpush2.msra.mxu0 0.0
    %2112 = vmatprep.subr.mxu0 0.0
    %2113 = vmatpush2.msra.mxu0 0.0
    %2114 = vmatprep.subr.mxu0 0.0
    %2115 = vmatpush2.msra.mxu0 0.0
    %2116 = vmatprep.subr.mxu0 0.0
    %2117 = vmatpush2.msra.mxu0 0.0
    %2118 = vmatprep.mubr.f32.mxu0 0.0
    %2119 = vmatmul.mubr.f32.gmra.mxu0 %v1655
    %v2120 = vpop.f32.mrf.mxu0
    %v2121 = vadd.f32 0.0, %v2120
    %v2122 = vpop.f32.mrf.mxu0
    %2123 = vmatprep.mubr.f32.mxu0 0.0
    %2124 = vmatmul.mubr.f32.gmra.mxu0 %v1658
    %v2125 = vpop.f32.mrf.mxu0
    %v2126 = vadd.f32 0.0, %v2125
    %v2127 = vpop.f32.mrf.mxu0
    %2128 = vmatprep.mubr.f32.mxu0 0.0
    %2129 = vmatmul.mubr.f32.gmra.mxu0 %v1661
    %v2130 = vpop.f32.mrf.mxu0
    %v2131 = vadd.f32 0.0, %v2130
    %v2132 = vpop.f32.mrf.mxu0
    %2133 = vmatprep.mubr.f32.mxu0 0.0
    %2134 = vmatmul.mubr.f32.gmra.mxu0 %v1664
    %v2135 = vpop.f32.mrf.mxu0
    %v2136 = vadd.f32 0.0, %v2135
    %v2137 = vpop.f32.mrf.mxu0
    %2138 = vmatprep.mubr.f32.mxu0 0.0
    %2139 = vmatmul.mubr.f32.gmra.mxu0 %v1667
    %v2140 = vpop.f32.mrf.mxu0
    %v2141 = vadd.f32 0.0, %v2140
    %v2142 = vpop.f32.mrf.mxu0
    %2143 = vmatprep.mubr.f32.mxu0 0.0
    %2144 = vmatmul.mubr.f32.gmra.mxu0 %v1670
    %v2145 = vpop.f32.mrf.mxu0
    %v2146 = vadd.f32 0.0, %v2145
    %v2147 = vpop.f32.mrf.mxu0
    %2148 = vmatprep.mubr.f32.mxu0 0.0
    %2149 = vmatmul.mubr.f32.gmra.mxu0 %v1673
    %v2150 = vpop.f32.mrf.mxu0
    %v2151 = vadd.f32 0.0, %v2150
    %v2152 = vpop.f32.mrf.mxu0
    %2153 = vdwg.mxu0
    %v2154 = vadd.f32 %v1639, %v2121
    %v2155 = vadd.f32 %v1640, %v2126
    %v2156 = vadd.f32 %v1641, %v2131
    %v2157 = vadd.f32 %v1642, %v2136
    %v2158 = vadd.f32 %v1643, %v2141
    %v2159 = vadd.f32 %v1644, %v2146
    %v2160 = vadd.f32 %v1645, %v2151
    %vm2161 = vcmp.ge.f32.partialorder %v2154, 0.0
    %vm2162 = vcmp.ge.f32.partialorder %v2155, 0.0
    %vm2163 = vcmp.ge.f32.partialorder %v2156, 0.0
    %vm2164 = vcmp.ge.f32.partialorder %v2157, 0.0
    %vm2165 = vcmp.ge.f32.partialorder %v2158, 0.0
    %vm2166 = vcmp.ge.f32.partialorder %v2159, 0.0
    %vm2167 = vcmp.ge.f32.partialorder %v2160, 0.0
    %v2168 = vmul.f32 %v2154, 0.01
    %v2169 = vmul.f32 %v2155, 0.01
    %v2170 = vmul.f32 %v2156, 0.01
    %v2171 = vmul.f32 %v2157, 0.01
    %v2172 = vmul.f32 %v2158, 0.01
    %v2173 = vmul.f32 %v2159, 0.01
    %v2174 = vmul.f32 %v2160, 0.01
    %v2175 = vsel %vm2161, %v2154, %v2168
    %v2176 = vsel %vm2162, %v2155, %v2169
    %v2177 = vsel %vm2163, %v2156, %v2170
    %v2178 = vsel %vm2164, %v2157, %v2171
    %v2179 = vsel %vm2165, %v2158, %v2172
    %v2180 = vsel %vm2166, %v2159, %v2173
    %v2181 = vsel %vm2167, %v2160, %v2174
    %s2182 = scalar_lea.vmem %s4, 280
    %v2183 = vld [vmem:[%s2182] sm:$0xff]
    %v2184 = vld [vmem:[%s2182 + $0x8] sm:$0xff]
    %v2185 = vld [vmem:[%s2182 + $0x10] sm:$0xff]
    %v2186 = vld [vmem:[%s2182 + $0x18] sm:$0xff]
    %v2187 = vld [vmem:[%s2182 + $0x20] sm:$0xff]
    %v2188 = vld [vmem:[%s2182 + $0x28] sm:$0xff]
    %v2189 = vld [vmem:[%s2182 + $0x30] sm:$0x3]
    %2191 = vset.pattern.permute.xlu0 0
    %2192 = vperm.xlu0 %2191, %v2183
    %v2193 = vpop.permute.xlu0 %2192
    %2196 = vset.pattern.permute.xlu0 0
    %2197 = vperm.xlu0 %2196, %v2184
    %v2198 = vpop.permute.xlu0 %2197
    %2201 = vset.pattern.permute.xlu0 0
    %2202 = vperm.xlu0 %2201, %v2185
    %v2203 = vpop.permute.xlu0 %2202
    %2206 = vset.pattern.permute.xlu0 0
    %2207 = vperm.xlu0 %2206, %v2186
    %v2208 = vpop.permute.xlu0 %2207
    %2211 = vset.pattern.permute.xlu0 0
    %2212 = vperm.xlu0 %2211, %v2187
    %v2213 = vpop.permute.xlu0 %2212
    %2216 = vset.pattern.permute.xlu0 0
    %2217 = vperm.xlu0 %2216, %v2188
    %v2218 = vpop.permute.xlu0 %2217
    %2221 = vset.pattern.permute.xlu0 0
    %2222 = vperm.xlu0 %2221, %v2189
    %v2223 = vpop.permute.xlu0 %2222
    %v2225 = vmul.f32 %v2175, %v2193
    %v2226 = vmul.f32 %v2176, %v2198
    %v2227 = vmul.f32 %v2177, %v2203
    %v2228 = vmul.f32 %v2178, %v2208
    %v2229 = vmul.f32 %v2179, %v2213
    %v2230 = vmul.f32 %v2180, %v2218
    %v2231 = vmul.f32 %v2181, %v2223
    %v2232 = vadd.f32 %v2044, %v2225
    %v2233 = vadd.f32 %v2045, %v2226
    %v2234 = vadd.f32 %v2046, %v2227
    %v2235 = vadd.f32 %v2047, %v2228
    %v2236 = vadd.f32 %v2048, %v2229
    %v2237 = vadd.f32 %v2049, %v2230
    %v2238 = vadd.f32 %v2050, %v2231
    %v2239 = vadd.f32 %v2232, %v2233
    %v2240 = vadd.f32 %v2239, %v2234
    %v2241 = vadd.f32 %v2240, %v2235
    %v2242 = vadd.f32 %v2241, %v2236
    %v2243 = vadd.f32 %v2242, %v2237
    %v2244 = vsel %vm698, %v2238, 0.0
    %v2245 = vadd.f32 %v2243, %v2244
    %v2246 = vrot.slane %v2245, 4
    %v2247 = vadd.f32 %v2245, %v2246
    %v2248 = vrot.slane %v2247, 2
    %v2249 = vadd.f32 %v2247, %v2248
    %v2250 = vrot.slane %v2249, 1
    %v2251 = vadd.f32 %v2249, %v2250
    %v2252 = vstv %s25
    %v2253 = vadd.f32 %v2251, %v2252
    %2254 = vst [vmem:[#allocation3] sm:$0x1] %v2253
    // Predicated region
    $region26: #{tpu_custom_call.1} parent=1 // pred_check
      _
    $region27: #{tpu_custom_call.1} parent=1 // pred_check_branch
      %2256 = sbr.rel (0) target = $region29
    $region28: #{tpu_custom_call.1} parent=1 // pred_region
      %s2258 = ssub.s32 16, 16
      %2259 = vsyncadd [#allocation4], %s2258
      %s2261 = sshll.u32 [#allocation3], 4
      %s2262 = int_to_ptr.vmem [resolvable:$true] %s2261
      %2264 = dma.vmem_to_hbm [thread:$0]  %s2262, 16, %s6, [#allocation4]
    $region29: #{tpu_custom_call.1} parent=1 // pred_fallthru
      _
    // Predicated region
    $region30: #{tpu_custom_call.1} parent=1 // pred_check
      _
    $region31: #{tpu_custom_call.1} parent=1 // pred_check_branch
      %2266 = sbr.rel (0) target = $region33
    $region32: #{tpu_custom_call.1} parent=1 // pred_region
      %2267 = dma.done [#allocation4], 16
    $region33: #{tpu_custom_call.1} parent=1 // pred_fallthru
      _
    %2268 = vsyncpa [#allocation4], 1

</llo_original>
